<compile_context>
chip_gen: v6e
topology: v6e:2x2x1
jax: 0.10.0
libtpu: 0.0.40
codegen_flags: <defaults>
</compile_context>

<pallas_src>
import functools

import jax
import jax.numpy as jnp
import numpy as np
from jax import lax
from jax.experimental import pallas as pl
from jax.experimental.pallas import tpu as pltpu

EPS = 1e-5
_VMEM_LIMIT = 32 * 1024 * 1024  # explicit, valid on v5e/v6e/v7x


# --------------------------------------------------------------------------
# tile-size helpers
# --------------------------------------------------------------------------
def _pick_th(H, W):
    """Row-tile height: sublane aligned, prefer TH*W >= 256 (v6e/v7x MXU)."""
    cands = [d for d in range(8, H + 1, 8) if H % d == 0] or [H]
    for d in cands:
        if d * W >= 256:
            return d
    return cands[-1]


def _pick_tr(R):
    """Pass-3 row-tile: largest sublane-aligned divisor of R up to 2048."""
    cands = [d for d in range(8, min(R, 2048) + 1, 8) if R % d == 0]
    return max(cands) if cands else R


# --------------------------------------------------------------------------
# banded 3x3 conv weights: (Cout, Cin, 3, 3) -> (3, W*C, W*C)
#   Wb[dy, xin*C+ci, xo*C+co] = w[co, ci, dy, xin-xo+1]  (|xin-xo| <= 1, else 0)
# The missing diagonals at xo = 0 / W-1 ARE the zero column padding, so the
# kernel never pads columns at all.
# --------------------------------------------------------------------------
def _banded_weights(w_oihw, W, C):
    A = jnp.transpose(w_oihw, (2, 3, 1, 0)).astype(jnp.float32)  # (3,3,Cin,Cout)
    mats = []
    for dy in range(3):
        acc = jnp.zeros((W * C, W * C), jnp.float32)
        for dx in range(3):
            sel = np.zeros((W, W), np.float32)      # sel[xin, xo] = 1 iff xin == xo+dx-1
            xo = np.arange(W)
            xin = xo + dx - 1
            ok = (xin >= 0) & (xin < W)
            sel[xin[ok], xo[ok]] = 1.0
            acc = acc + jnp.kron(jnp.asarray(sel), A[dy, dx])
        mats.append(acc)
    return jnp.stack(mats).astype(jnp.bfloat16)


# --------------------------------------------------------------------------
# conv 3x3 tile kernel: 3 banded MXU matmuls + lane-dense BN partial stats
# --------------------------------------------------------------------------
def _conv3x3_kernel(*refs, TH, W, C, fuse_act, has_halo):
    WC = W * C
    idx = 0
    xc_ref = refs[idx]; idx += 1
    if has_halo:
        xp_ref = refs[idx]; xn_ref = refs[idx + 1]; idx += 2
    w_ref = refs[idx]; idx += 1
    if fuse_act:
        sc_ref = refs[idx]; sh_ref = refs[idx + 1]; idx += 2
    y_ref, st_ref = refs[idx], refs[idx + 1]

    def act(v):  # fused bn1 + relu (f32 math, bf16 MXU operand out)
        return jnp.maximum(v.astype(jnp.float32) * sc_ref[...] + sh_ref[...],
                           0.0).astype(jnp.bfloat16)

    xc = xc_ref[0]                                    # (TH, W*C) bf16
    if fuse_act:
        xc = act(xc)

    zero_row = jnp.zeros((1, WC), xc.dtype)
    if has_halo:
        t = pl.program_id(1)
        top = xp_ref[0, TH - 1:TH, :]                 # last row of prev tile
        bot = xn_ref[0, 0:1, :]                       # first row of next tile
        if fuse_act:
            top = act(top)
            bot = act(bot)
        top = jnp.where(t > 0, top, zero_row)                      # image border -> 0
        bot = jnp.where(t < pl.num_programs(1) - 1, bot, zero_row)
    else:
        top = zero_row
        bot = zero_row

    # dy bands: rows r-1 / r / r+1 of the (post-activation) input
    band0 = jnp.concatenate([top, xc[:TH - 1]], axis=0)
    band2 = jnp.concatenate([xc[1:], bot], axis=0)

    acc = jnp.dot(xc, w_ref[1], preferred_element_type=jnp.float32)
    acc += jnp.dot(band0, w_ref[0], preferred_element_type=jnp.float32)
    acc += jnp.dot(band2, w_ref[2], preferred_element_type=jnp.float32)

    yb = acc.astype(jnp.bfloat16)
    y_ref[...] = yb[None]                             # lane-dense (1, TH, W*C) store

    # BN partial stats on the SAME rounded tensor the scale/shift will hit,
    # lane-dense: (2, W*C); per-channel fold over the W lane replicas is host-side.
    yf = yb.astype(jnp.float32)
    s = jnp.sum(yf, axis=0, keepdims=True)
    ss = jnp.sum(yf * yf, axis=0, keepdims=True)
    st_ref[...] = jnp.concatenate([s, ss], axis=0)[None, None]


def _conv3x3_pass(x2d, wb, scale, shift, *, N, H, W, C, TH, fuse_act):
    WC = W * C
    HT = H // TH
    has_halo = HT > 1

    kernel = functools.partial(_conv3x3_kernel, TH=TH, W=W, C=C,
                               fuse_act=fuse_act, has_halo=has_halo)

    in_specs = [pl.BlockSpec((1, TH, WC), lambda n, t: (n, t, 0))]
    args = [x2d]
    if has_halo:
        in_specs += [
            pl.BlockSpec((1, TH, WC),
                         lambda n, t: (n, jnp.maximum(t - 1, 0), 0)),
            pl.BlockSpec((1, TH, WC),
                         lambda n, t: (n, jnp.minimum(t + 1, HT - 1), 0)),
        ]
        args += [x2d, x2d]
    in_specs.append(pl.BlockSpec((3, WC, WC), lambda n, t: (0, 0, 0)))
    args.append(wb)
    if fuse_act:
        in_specs += [pl.BlockSpec((1, WC), lambda n, t: (0, 0)),
                     pl.BlockSpec((1, WC), lambda n, t: (0, 0))]
        args += [scale, shift]

    out_shape = (jax.ShapeDtypeStruct((N, H, WC), jnp.bfloat16),
                 jax.ShapeDtypeStruct((N, HT, 2, WC), jnp.float32))
    out_specs = (pl.BlockSpec((1, TH, WC), lambda n, t: (n, t, 0)),
                 pl.BlockSpec((1, 1, 2, WC), lambda n, t: (n, t, 0, 0)))

    return pl.pallas_call(
        kernel,
        out_shape=out_shape,
        grid=(N, HT),
        in_specs=in_specs,
        out_specs=out_specs,
        compiler_params=pltpu.CompilerParams(
            dimension_semantics=("parallel", "parallel"),
            vmem_limit_bytes=_VMEM_LIMIT),
    )(*args)


# --------------------------------------------------------------------------
# final elementwise pass: bn2 + identity shortcut + relu (lane-dense, bf16 in)
# --------------------------------------------------------------------------
def _bn_add_relu_kernel(y_ref, x_ref, sc_ref, sh_ref, o_ref):
    c2 = y_ref[...].astype(jnp.float32) * sc_ref[...] + sh_ref[...]
    o_ref[...] = jnp.maximum(c2 + x_ref[...].astype(jnp.float32), 0.0)


def _bn_add_relu_pass(y2, x2, scale, shift, *, TR):
    R, WC = y2.shape
    return pl.pallas_call(
        _bn_add_relu_kernel,
        out_shape=jax.ShapeDtypeStruct((R, WC), jnp.float32),
        grid=(R // TR,),
        in_specs=[pl.BlockSpec((TR, WC), lambda r: (r, 0)),
                  pl.BlockSpec((TR, WC), lambda r: (r, 0)),
                  pl.BlockSpec((1, WC), lambda r: (0, 0)),
                  pl.BlockSpec((1, WC), lambda r: (0, 0))],
        out_specs=pl.BlockSpec((TR, WC), lambda r: (r, 0)),
        compiler_params=pltpu.CompilerParams(
            dimension_semantics=("parallel",),
            vmem_limit_bytes=_VMEM_LIMIT),
    )(y2, x2, scale, shift)


# --------------------------------------------------------------------------
# public wrapper (NCHW in / NCHW out, like the PyTorch module)
# --------------------------------------------------------------------------
def res_basic_block(x_nchw, params, *, TH=None):
    x = jnp.transpose(x_nchw, (0, 2, 3, 1))                       # NHWC
    N, H, W, C = x.shape
    Cout = params["w1"].shape[0]
    assert C == Cout, "identity shortcut requires Cin == Cout (downsampling=False)"
    WC = W * C
    if TH is None:
        TH = _pick_th(H, W)
    assert H % TH == 0
    cnt = float(N * H * W)

    # single lane-dense bf16 activation buffer; also reused as the shortcut.
    x2d = x.astype(jnp.bfloat16).reshape(N, H, WC)

    wb1 = _banded_weights(params["w1"], W, C)
    wb2 = _banded_weights(params["w2"], W, C)
    # NOTE: conv biases b1/b2 are exactly cancelled by the training-mode BN
    # mean subtraction, so they are dropped from the kernels (dead work).

    def fold_bn(st, gamma, beta):
        # st: (N, HT, 2, W*C); fold tiles + W lane replicas per channel.
        # NOTE: E[x^2]-E[x]^2 in f32 is adequate at these sizes; use a shifted
        # formulation for very large N*H*W.
        s = jnp.sum(st[:, :, 0, :].reshape(-1, W, C), axis=(0, 1))
        ss = jnp.sum(st[:, :, 1, :].reshape(-1, W, C), axis=(0, 1))
        mu = s / cnt
        var = jnp.maximum(ss / cnt - mu * mu, 0.0)
        scale = gamma * lax.rsqrt(var + EPS)
        shift = beta - mu * scale
        return (jnp.tile(scale, W).reshape(1, WC),
                jnp.tile(shift, W).reshape(1, WC))

    # ---- pass 1: conv1 + BN1 partial stats --------------------------------
    y1, st1 = _conv3x3_pass(x2d, wb1, None, None,
                            N=N, H=H, W=W, C=C, TH=TH, fuse_act=False)
    sc1, sh1 = fold_bn(st1, params["g1"], params["be1"])

    # ---- pass 2: fused bn1+relu, conv2 + BN2 partial stats -----------------
    y2, st2 = _conv3x3_pass(y1, wb2, sc1, sh1,
                            N=N, H=H, W=W, C=C, TH=TH, fuse_act=True)
    sc2, sh2 = fold_bn(st2, params["g2"], params["be2"])

    # ---- pass 3: bn2 + identity shortcut + relu ----------------------------
    R = N * H
    TR = _pick_tr(R)
    out2d = _bn_add_relu_pass(y2.reshape(R, WC), x2d.reshape(R, WC),
                              sc2, sh2, TR=TR)
    out = out2d.reshape(N, H, W, C)
    return jnp.transpose(out, (0, 3, 1, 2))                       # -> NCHW


# ---------------- pure-JAX reference (f32, same math, NCHW) ----------------
def ref_forward(x, p):
    def conv3x3(z, w, b):
        y = lax.conv_general_dilated(
            z, w, window_strides=(1, 1), padding=((1, 1), (1, 1)),
            dimension_numbers=("NCHW", "OIHW", "NCHW"))
        return y + b[None, :, None, None]

    def bn(z, g, be):
        mu = jnp.mean(z, axis=(0, 2, 3), keepdims=True)
        var = jnp.mean((z - mu) ** 2, axis=(0, 2, 3), keepdims=True)
        return ((z - mu) * lax.rsqrt(var + EPS)
                * g[None, :, None, None] + be[None, :, None, None])

    c1 = jax.nn.relu(bn(conv3x3(x, p["w1"], p["b1"]), p["g1"], p["be1"]))
    c2 = bn(conv3x3(c1, p["w2"], p["b2"]), p["g2"], p["be2"])
    return jax.nn.relu(c2 + x)


if __name__ == "__main__":
    key = jax.random.PRNGKey(0)
    N, C, H, W = 2, 8, 16, 16          # W*C = 128 -> lane-dense working layout

    k = jax.random.split(key, 6)
    x = jax.random.normal(k[0], (N, C, H, W), jnp.float32)

    params = {
        "w1": 0.1 * jax.random.normal(k[1], (C, C, 3, 3), jnp.float32),  # OIHW
        "b1": 0.05 * jax.random.normal(k[2], (C,), jnp.float32),
        "w2": 0.1 * jax.random.normal(k[3], (C, C, 3, 3), jnp.float32),
        "b2": 0.05 * jax.random.normal(k[4], (C,), jnp.float32),
        "g1": jnp.ones((C,), jnp.float32) + 0.01 * jax.random.normal(k[5], (C,)),
        "be1": jnp.full((C,), 0.02, jnp.float32),
        "g2": jnp.ones((C,), jnp.float32),
        "be2": jnp.zeros((C,), jnp.float32),
    }

    out = jax.block_until_ready(jax.jit(res_basic_block)(x, params))
    ref = jax.block_until_ready(ref_forward(x, params))

    assert out.shape == (N, C, H, W)
    # bf16 MXU operands / bf16 residual (f32 accumulation & BN math) -> bf16-level
    # tolerance vs f32 reference.
    np.testing.assert_allclose(np.asarray(out), np.asarray(ref),
                               rtol=3e-2, atol=3e-2)
    print("KERNEL_OK")
</pallas_src>

<mosaic_0001>
module attributes {stable_mosaic.version = 11 : i64} {
  func.func @_conv3x3_kernel(%arg0: i32, %arg1: i32, %arg2: memref<1x16x128xbf16, #tpu.memory_space<vmem>>, %arg3: memref<3x128x128xbf16, #tpu.memory_space<vmem>>, %arg4: memref<1x16x128xbf16, #tpu.memory_space<vmem>>, %arg5: memref<1x1x2x128xf32, #tpu.memory_space<vmem>>) attributes {dimension_semantics = [#tpu.dimension_semantics<parallel>, #tpu.dimension_semantics<parallel>], iteration_bounds = array<i64: 2, 1>, scalar_prefetch = 0 : i64, scratch_operands = 0 : i64, tpu.core_type = #tpu.core_type<tc>, window_params = [{transform_indices = @transform_0, window_bounds = array<i64: 1, 16, 128>}, {pipeline_mode = #tpu.pipeline_mode<synchronous>, transform_indices = @transform_1, window_bounds = array<i64: 3, 128, 128>}, {transform_indices = @transform_2, window_bounds = array<i64: 1, 16, 128>}, {transform_indices = @transform_3, window_bounds = array<i64: 1, 1, 2, 128>}]} {
    %c0 = arith.constant 0 : index
    %c0_0 = arith.constant 0 : index
    %c0_1 = arith.constant 0 : index
    %0 = vector.load %arg2[%c0, %c0_0, %c0_1] : memref<1x16x128xbf16, #tpu.memory_space<vmem>>, vector<1x16x128xbf16>
    %1 = vector.shape_cast %0 : vector<1x16x128xbf16> to vector<16x128xbf16>
    %cst = arith.constant 0.000000e+00 : bf16
    %2 = vector.broadcast %cst : bf16 to vector<1x128xbf16>
    %3 = vector.extract_strided_slice %1 {offsets = [0, 0], sizes = [15, 128], strides = [1, 1]} : vector<16x128xbf16> to vector<15x128xbf16>
    %4 = tpu.concatenate %2, %3 in 0 : vector<1x128xbf16>, vector<15x128xbf16> -> vector<16x128xbf16>
    %5 = vector.extract_strided_slice %1 {offsets = [1, 0], sizes = [15, 128], strides = [1, 1]} : vector<16x128xbf16> to vector<15x128xbf16>
    %6 = tpu.concatenate %5, %2 in 0 : vector<15x128xbf16>, vector<1x128xbf16> -> vector<16x128xbf16>
    %c1 = arith.constant 1 : index
    %c0_2 = arith.constant 0 : index
    %c0_3 = arith.constant 0 : index
    %7 = vector.load %arg3[%c1, %c0_2, %c0_3] : memref<3x128x128xbf16, #tpu.memory_space<vmem>>, vector<1x128x128xbf16>
    %8 = vector.shape_cast %7 : vector<1x128x128xbf16> to vector<128x128xbf16>
    %cst_4 = arith.constant dense<0.000000e+00> : vector<16x128xf32>
    %9 = tpu.matmul %1, %8, %cst_4 {dimension_numbers = #tpu.dot_dimension_numbers<[1], [0], [0], [1], [0, 0, 1, 1], [], []>} : vector<16x128xbf16>, vector<128x128xbf16>, vector<16x128xf32> -> vector<16x128xf32>
    %c0_5 = arith.constant 0 : index
    %c0_6 = arith.constant 0 : index
    %c0_7 = arith.constant 0 : index
    %10 = vector.load %arg3[%c0_5, %c0_6, %c0_7] : memref<3x128x128xbf16, #tpu.memory_space<vmem>>, vector<1x128x128xbf16>
    %11 = vector.shape_cast %10 : vector<1x128x128xbf16> to vector<128x128xbf16>
    %cst_8 = arith.constant dense<0.000000e+00> : vector<16x128xf32>
    %12 = tpu.matmul %4, %11, %cst_8 {dimension_numbers = #tpu.dot_dimension_numbers<[1], [0], [0], [1], [0, 0, 1, 1], [], []>} : vector<16x128xbf16>, vector<128x128xbf16>, vector<16x128xf32> -> vector<16x128xf32>
    %13 = arith.addf %9, %12 : vector<16x128xf32>
    %c2 = arith.constant 2 : index
    %c0_9 = arith.constant 0 : index
    %c0_10 = arith.constant 0 : index
    %14 = vector.load %arg3[%c2, %c0_9, %c0_10] : memref<3x128x128xbf16, #tpu.memory_space<vmem>>, vector<1x128x128xbf16>
    %15 = vector.shape_cast %14 : vector<1x128x128xbf16> to vector<128x128xbf16>
    %cst_11 = arith.constant dense<0.000000e+00> : vector<16x128xf32>
    %16 = tpu.matmul %6, %15, %cst_11 {dimension_numbers = #tpu.dot_dimension_numbers<[1], [0], [0], [1], [0, 0, 1, 1], [], []>} : vector<16x128xbf16>, vector<128x128xbf16>, vector<16x128xf32> -> vector<16x128xf32>
    %17 = arith.addf %13, %16 : vector<16x128xf32>
    %18 = arith.truncf %17 : vector<16x128xf32> to vector<16x128xbf16>
    %19 = vector.shape_cast %18 : vector<16x128xbf16> to vector<1x16x128xbf16>
    %c0_12 = arith.constant 0 : index
    %c0_13 = arith.constant 0 : index
    %c0_14 = arith.constant 0 : index
    %20 = vector.load %arg4[%c0_12, %c0_13, %c0_14] : memref<1x16x128xbf16, #tpu.memory_space<vmem>>, vector<1x16x128xbf16>
    tpu.vector_store %arg4[%c0_12, %c0_13, %c0_14], %19 {strides = array<i32>} : memref<1x16x128xbf16, #tpu.memory_space<vmem>>, vector<1x16x128xbf16>,
    %21 = arith.extf %18 : vector<16x128xbf16> to vector<16x128xf32>
    %cst_15 = arith.constant dense<0.000000e+00> : vector<128xf32>
    %22 = vector.multi_reduction <add>, %21, %cst_15 [0] : vector<16x128xf32> to vector<128xf32>
    %23 = vector.shape_cast %22 : vector<128xf32> to vector<1x128xf32>
    %24 = arith.mulf %21, %21 : vector<16x128xf32>
    %cst_16 = arith.constant dense<0.000000e+00> : vector<128xf32>
    %25 = vector.multi_reduction <add>, %24, %cst_16 [0] : vector<16x128xf32> to vector<128xf32>
    %26 = vector.shape_cast %25 : vector<128xf32> to vector<1x128xf32>
    %27 = tpu.concatenate %23, %26 in 0 : vector<1x128xf32>, vector<1x128xf32> -> vector<2x128xf32>
    %28 = vector.shape_cast %27 : vector<2x128xf32> to vector<1x1x2x128xf32>
    %c0_17 = arith.constant 0 : index
    %c0_18 = arith.constant 0 : index
    %c0_19 = arith.constant 0 : index
    %c0_20 = arith.constant 0 : index
    %29 = vector.load %arg5[%c0_17, %c0_18, %c0_19, %c0_20] : memref<1x1x2x128xf32, #tpu.memory_space<vmem>>, vector<1x1x2x128xf32>
    tpu.vector_store %arg5[%c0_17, %c0_18, %c0_19, %c0_20], %28 {strides = array<i32>} : memref<1x1x2x128xf32, #tpu.memory_space<vmem>>, vector<1x1x2x128xf32>,
    return
  }
  func.func @transform_0(%arg0: i32, %arg1: i32) -> (i32, i32, i32) {
    %c0_i32 = arith.constant 0 : i32
    %c0_i32_0 = arith.constant 0 : i32
    return %arg0, %arg1, %c0_i32 : i32, i32, i32
  }
  func.func @transform_1(%arg0: i32, %arg1: i32) -> (i32, i32, i32) {
    %c0_i32 = arith.constant 0 : i32
    %c0_i32_0 = arith.constant 0 : i32
    %c0_i32_1 = arith.constant 0 : i32
    %c0_i32_2 = arith.constant 0 : i32
    return %c0_i32, %c0_i32_0, %c0_i32_1 : i32, i32, i32
  }
  func.func @transform_2(%arg0: i32, %arg1: i32) -> (i32, i32, i32) {
    %c0_i32 = arith.constant 0 : i32
    %c0_i32_0 = arith.constant 0 : i32
    return %arg0, %arg1, %c0_i32 : i32, i32, i32
  }
  func.func @transform_3(%arg0: i32, %arg1: i32) -> (i32, i32, i32, i32) {
    %c0_i32 = arith.constant 0 : i32
    %c0_i32_0 = arith.constant 0 : i32
    %c0_i32_1 = arith.constant 0 : i32
    return %arg0, %arg1, %c0_i32, %c0_i32_0 : i32, i32, i32, i32
  }
}

module attributes {stable_mosaic.version = 11 : i64} {
  func.func @_conv3x3_kernel(%arg0: i32, %arg1: i32, %arg2: memref<1x16x128xbf16, #tpu.memory_space<vmem>>, %arg3: memref<3x128x128xbf16, #tpu.memory_space<vmem>>, %arg4: memref<1x128xf32, #tpu.memory_space<vmem>>, %arg5: memref<1x128xf32, #tpu.memory_space<vmem>>, %arg6: memref<1x16x128xbf16, #tpu.memory_space<vmem>>, %arg7: memref<1x1x2x128xf32, #tpu.memory_space<vmem>>) attributes {dimension_semantics = [#tpu.dimension_semantics<parallel>, #tpu.dimension_semantics<parallel>], iteration_bounds = array<i64: 2, 1>, scalar_prefetch = 0 : i64, scratch_operands = 0 : i64, tpu.core_type = #tpu.core_type<tc>, window_params = [{transform_indices = @transform_0, window_bounds = array<i64: 1, 16, 128>}, {pipeline_mode = #tpu.pipeline_mode<synchronous>, transform_indices = @transform_1, window_bounds = array<i64: 3, 128, 128>}, {pipeline_mode = #tpu.pipeline_mode<synchronous>, transform_indices = @transform_2, window_bounds = array<i64: 1, 128>}, {pipeline_mode = #tpu.pipeline_mode<synchronous>, transform_indices = @transform_3, window_bounds = array<i64: 1, 128>}, {transform_indices = @transform_4, window_bounds = array<i64: 1, 16, 128>}, {transform_indices = @transform_5, window_bounds = array<i64: 1, 1, 2, 128>}]} {
    %c0 = arith.constant 0 : index
    %c0_0 = arith.constant 0 : index
    %c0_1 = arith.constant 0 : index
    %0 = vector.load %arg2[%c0, %c0_0, %c0_1] : memref<1x16x128xbf16, #tpu.memory_space<vmem>>, vector<1x16x128xbf16>
    %1 = vector.shape_cast %0 : vector<1x16x128xbf16> to vector<16x128xbf16>
    %2 = arith.extf %1 : vector<16x128xbf16> to vector<16x128xf32>
    %c0_2 = arith.constant 0 : index
    %c0_3 = arith.constant 0 : index
    %3 = vector.load %arg4[%c0_2, %c0_3] : memref<1x128xf32, #tpu.memory_space<vmem>>, vector<1x128xf32>
    %4 = vector.broadcast %3 : vector<1x128xf32> to vector<16x128xf32>
    %5 = arith.mulf %2, %4 : vector<16x128xf32>
    %c0_4 = arith.constant 0 : index
    %c0_5 = arith.constant 0 : index
    %6 = vector.load %arg5[%c0_4, %c0_5] : memref<1x128xf32, #tpu.memory_space<vmem>>, vector<1x128xf32>
    %7 = vector.broadcast %6 : vector<1x128xf32> to vector<16x128xf32>
    %8 = arith.addf %5, %7 : vector<16x128xf32>
    %cst = arith.constant 0.000000e+00 : f32
    %9 = vector.broadcast %cst : f32 to vector<16x128xf32>
    %10 = arith.maximumf %8, %9 : vector<16x128xf32>
    %11 = arith.truncf %10 : vector<16x128xf32> to vector<16x128xbf16>
    %cst_6 = arith.constant 0.000000e+00 : bf16
    %12 = vector.broadcast %cst_6 : bf16 to vector<1x128xbf16>
    %13 = vector.extract_strided_slice %11 {offsets = [0, 0], sizes = [15, 128], strides = [1, 1]} : vector<16x128xbf16> to vector<15x128xbf16>
    %14 = tpu.concatenate %12, %13 in 0 : vector<1x128xbf16>, vector<15x128xbf16> -> vector<16x128xbf16>
    %15 = vector.extract_strided_slice %11 {offsets = [1, 0], sizes = [15, 128], strides = [1, 1]} : vector<16x128xbf16> to vector<15x128xbf16>
    %16 = tpu.concatenate %15, %12 in 0 : vector<15x128xbf16>, vector<1x128xbf16> -> vector<16x128xbf16>
    %c1 = arith.constant 1 : index
    %c0_7 = arith.constant 0 : index
    %c0_8 = arith.constant 0 : index
    %17 = vector.load %arg3[%c1, %c0_7, %c0_8] : memref<3x128x128xbf16, #tpu.memory_space<vmem>>, vector<1x128x128xbf16>
    %18 = vector.shape_cast %17 : vector<1x128x128xbf16> to vector<128x128xbf16>
    %cst_9 = arith.constant dense<0.000000e+00> : vector<16x128xf32>
    %19 = tpu.matmul %11, %18, %cst_9 {dimension_numbers = #tpu.dot_dimension_numbers<[1], [0], [0], [1], [0, 0, 1, 1], [], []>} : vector<16x128xbf16>, vector<128x128xbf16>, vector<16x128xf32> -> vector<16x128xf32>
    %c0_10 = arith.constant 0 : index
    %c0_11 = arith.constant 0 : index
    %c0_12 = arith.constant 0 : index
    %20 = vector.load %arg3[%c0_10, %c0_11, %c0_12] : memref<3x128x128xbf16, #tpu.memory_space<vmem>>, vector<1x128x128xbf16>
    %21 = vector.shape_cast %20 : vector<1x128x128xbf16> to vector<128x128xbf16>
    %cst_13 = arith.constant dense<0.000000e+00> : vector<16x128xf32>
    %22 = tpu.matmul %14, %21, %cst_13 {dimension_numbers = #tpu.dot_dimension_numbers<[1], [0], [0], [1], [0, 0, 1, 1], [], []>} : vector<16x128xbf16>, vector<128x128xbf16>, vector<16x128xf32> -> vector<16x128xf32>
    %23 = arith.addf %19, %22 : vector<16x128xf32>
    %c2 = arith.constant 2 : index
    %c0_14 = arith.constant 0 : index
    %c0_15 = arith.constant 0 : index
    %24 = vector.load %arg3[%c2, %c0_14, %c0_15] : memref<3x128x128xbf16, #tpu.memory_space<vmem>>, vector<1x128x128xbf16>
    %25 = vector.shape_cast %24 : vector<1x128x128xbf16> to vector<128x128xbf16>
    %cst_16 = arith.constant dense<0.000000e+00> : vector<16x128xf32>
    %26 = tpu.matmul %16, %25, %cst_16 {dimension_numbers = #tpu.dot_dimension_numbers<[1], [0], [0], [1], [0, 0, 1, 1], [], []>} : vector<16x128xbf16>, vector<128x128xbf16>, vector<16x128xf32> -> vector<16x128xf32>
    %27 = arith.addf %23, %26 : vector<16x128xf32>
    %28 = arith.truncf %27 : vector<16x128xf32> to vector<16x128xbf16>
    %29 = vector.shape_cast %28 : vector<16x128xbf16> to vector<1x16x128xbf16>
    %c0_17 = arith.constant 0 : index
    %c0_18 = arith.constant 0 : index
    %c0_19 = arith.constant 0 : index
    %30 = vector.load %arg6[%c0_17, %c0_18, %c0_19] : memref<1x16x128xbf16, #tpu.memory_space<vmem>>, vector<1x16x128xbf16>
    tpu.vector_store %arg6[%c0_17, %c0_18, %c0_19], %29 {strides = array<i32>} : memref<1x16x128xbf16, #tpu.memory_space<vmem>>, vector<1x16x128xbf16>,
    %31 = arith.extf %28 : vector<16x128xbf16> to vector<16x128xf32>
    %cst_20 = arith.constant dense<0.000000e+00> : vector<128xf32>
    %32 = vector.multi_reduction <add>, %31, %cst_20 [0] : vector<16x128xf32> to vector<128xf32>
    %33 = vector.shape_cast %32 : vector<128xf32> to vector<1x128xf32>
    %34 = arith.mulf %31, %31 : vector<16x128xf32>
    %cst_21 = arith.constant dense<0.000000e+00> : vector<128xf32>
    %35 = vector.multi_reduction <add>, %34, %cst_21 [0] : vector<16x128xf32> to vector<128xf32>
    %36 = vector.shape_cast %35 : vector<128xf32> to vector<1x128xf32>
    %37 = tpu.concatenate %33, %36 in 0 : vector<1x128xf32>, vector<1x128xf32> -> vector<2x128xf32>
    %38 = vector.shape_cast %37 : vector<2x128xf32> to vector<1x1x2x128xf32>
    %c0_22 = arith.constant 0 : index
    %c0_23 = arith.constant 0 : index
    %c0_24 = arith.constant 0 : index
    %c0_25 = arith.constant 0 : index
    %39 = vector.load %arg7[%c0_22, %c0_23, %c0_24, %c0_25] : memref<1x1x2x128xf32, #tpu.memory_space<vmem>>, vector<1x1x2x128xf32>
    tpu.vector_store %arg7[%c0_22, %c0_23, %c0_24, %c0_25], %38 {strides = array<i32>} : memref<1x1x2x128xf32, #tpu.memory_space<vmem>>, vector<1x1x2x128xf32>,
    return
  }
  func.func @transform_0(%arg0: i32, %arg1: i32) -> (i32, i32, i32) {
    %c0_i32 = arith.constant 0 : i32
    %c0_i32_0 = arith.constant 0 : i32
    return %arg0, %arg1, %c0_i32 : i32, i32, i32
  }
  func.func @transform_1(%arg0: i32, %arg1: i32) -> (i32, i32, i32) {
    %c0_i32 = arith.constant 0 : i32
    %c0_i32_0 = arith.constant 0 : i32
    %c0_i32_1 = arith.constant 0 : i32
    %c0_i32_2 = arith.constant 0 : i32
    return %c0_i32, %c0_i32_0, %c0_i32_1 : i32, i32, i32
  }
  func.func @transform_2(%arg0: i32, %arg1: i32) -> (i32, i32) {
    %c0_i32 = arith.constant 0 : i32
    %c0_i32_0 = arith.constant 0 : i32
    %c0_i32_1 = arith.constant 0 : i32
    return %c0_i32, %c0_i32_0 : i32, i32
  }
  func.func @transform_3(%arg0: i32, %arg1: i32) -> (i32, i32) {
    %c0_i32 = arith.constant 0 : i32
    %c0_i32_0 = arith.constant 0 : i32
    %c0_i32_1 = arith.constant 0 : i32
    return %c0_i32, %c0_i32_0 : i32, i32
  }
  func.func @transform_4(%arg0: i32, %arg1: i32) -> (i32, i32, i32) {
    %c0_i32 = arith.constant 0 : i32
    %c0_i32_0 = arith.constant 0 : i32
    return %arg0, %arg1, %c0_i32 : i32, i32, i32
  }
  func.func @transform_5(%arg0: i32, %arg1: i32) -> (i32, i32, i32, i32) {
    %c0_i32 = arith.constant 0 : i32
    %c0_i32_0 = arith.constant 0 : i32
    %c0_i32_1 = arith.constant 0 : i32
    return %arg0, %arg1, %c0_i32, %c0_i32_0 : i32, i32, i32, i32
  }
}

module attributes {stable_mosaic.version = 11 : i64} {
  func.func @_bn_add_relu_kernel(%arg0: i32, %arg1: memref<32x128xbf16, #tpu.memory_space<vmem>>, %arg2: memref<32x128xbf16, #tpu.memory_space<vmem>>, %arg3: memref<1x128xf32, #tpu.memory_space<vmem>>, %arg4: memref<1x128xf32, #tpu.memory_space<vmem>>, %arg5: memref<32x128xf32, #tpu.memory_space<vmem>>) attributes {dimension_semantics = [#tpu.dimension_semantics<parallel>], iteration_bounds = array<i64: 1>, scalar_prefetch = 0 : i64, scratch_operands = 0 : i64, tpu.core_type = #tpu.core_type<tc>, window_params = [{transform_indices = @transform_0, window_bounds = array<i64: 32, 128>}, {transform_indices = @transform_1, window_bounds = array<i64: 32, 128>}, {pipeline_mode = #tpu.pipeline_mode<synchronous>, transform_indices = @transform_2, window_bounds = array<i64: 1, 128>}, {pipeline_mode = #tpu.pipeline_mode<synchronous>, transform_indices = @transform_3, window_bounds = array<i64: 1, 128>}, {transform_indices = @transform_4, window_bounds = array<i64: 32, 128>}]} {
    %c0 = arith.constant 0 : index
    %c0_0 = arith.constant 0 : index
    %0 = vector.load %arg1[%c0, %c0_0] : memref<32x128xbf16, #tpu.memory_space<vmem>>, vector<32x128xbf16>
    %1 = arith.extf %0 : vector<32x128xbf16> to vector<32x128xf32>
    %c0_1 = arith.constant 0 : index
    %c0_2 = arith.constant 0 : index
    %2 = vector.load %arg3[%c0_1, %c0_2] : memref<1x128xf32, #tpu.memory_space<vmem>>, vector<1x128xf32>
    %3 = vector.broadcast %2 : vector<1x128xf32> to vector<32x128xf32>
    %4 = arith.mulf %1, %3 : vector<32x128xf32>
    %c0_3 = arith.constant 0 : index
    %c0_4 = arith.constant 0 : index
    %5 = vector.load %arg4[%c0_3, %c0_4] : memref<1x128xf32, #tpu.memory_space<vmem>>, vector<1x128xf32>
    %6 = vector.broadcast %5 : vector<1x128xf32> to vector<32x128xf32>
    %7 = arith.addf %4, %6 : vector<32x128xf32>
    %c0_5 = arith.constant 0 : index
    %c0_6 = arith.constant 0 : index
    %8 = vector.load %arg2[%c0_5, %c0_6] : memref<32x128xbf16, #tpu.memory_space<vmem>>, vector<32x128xbf16>
    %9 = arith.extf %8 : vector<32x128xbf16> to vector<32x128xf32>
    %10 = arith.addf %7, %9 : vector<32x128xf32>
    %cst = arith.constant 0.000000e+00 : f32
    %11 = vector.broadcast %cst : f32 to vector<32x128xf32>
    %12 = arith.maximumf %10, %11 : vector<32x128xf32>
    %c0_7 = arith.constant 0 : index
    %c0_8 = arith.constant 0 : index
    %13 = vector.load %arg5[%c0_7, %c0_8] : memref<32x128xf32, #tpu.memory_space<vmem>>, vector<32x128xf32>
    tpu.vector_store %arg5[%c0_7, %c0_8], %12 {strides = array<i32>} : memref<32x128xf32, #tpu.memory_space<vmem>>, vector<32x128xf32>,
    return
  }
  func.func @transform_0(%arg0: i32) -> (i32, i32) {
    %c0_i32 = arith.constant 0 : i32
    %c0_i32_0 = arith.constant 0 : i32
    return %arg0, %c0_i32 : i32, i32
  }
  func.func @transform_1(%arg0: i32) -> (i32, i32) {
    %c0_i32 = arith.constant 0 : i32
    %c0_i32_0 = arith.constant 0 : i32
    return %arg0, %c0_i32 : i32, i32
  }
  func.func @transform_2(%arg0: i32) -> (i32, i32) {
    %c0_i32 = arith.constant 0 : i32
    %c0_i32_0 = arith.constant 0 : i32
    %c0_i32_1 = arith.constant 0 : i32
    return %c0_i32, %c0_i32_0 : i32, i32
  }
  func.func @transform_3(%arg0: i32) -> (i32, i32) {
    %c0_i32 = arith.constant 0 : i32
    %c0_i32_0 = arith.constant 0 : i32
    %c0_i32_1 = arith.constant 0 : i32
    return %c0_i32, %c0_i32_0 : i32, i32
  }
  func.func @transform_4(%arg0: i32) -> (i32, i32) {
    %c0_i32 = arith.constant 0 : i32
    %c0_i32_0 = arith.constant 0 : i32
    return %arg0, %c0_i32 : i32, i32
  }
}

</mosaic_0001>

<llo_original>
// kernel: tile.23
$region0: #{tile.23}
  #allocation0 [shape = 's32[1]{0}', space=sflag, size = 0x4, scoped, tag = 'scoped memory for tile.23']
  %s0 = inlined_call_operand.vmem [shape: f32[8], index: 0, kind: input, shape index: {}]
  %s1 = inlined_call_operand.vmem [shape: f32[16,8], index: 1, kind: output, shape index: {}]
  // Predicated region
  $region2: #{tile.23} parent=0 // pred_check
    _
  $region3: #{tile.23} parent=0 // pred_check_branch
    %3 = sbr.rel (0) target = $region5
  $region4: #{tile.23} parent=0 // pred_region
    _
  $region5: #{tile.23} parent=0 // pred_fallthru
    _
  %v4 = vld [vmem:[%s0] ss:$0 sm:$0xff]
  %5 = vst [vmem:[%s1] sm:$0xff] %v4
  %s6 = scalar_lea.vmem %s1, 8
  %7 = vst [vmem:[%s6] sm:$0xff] %v4

// kernel: tile.24
$region0: #{tile.24}
  %s0 = inlined_call_operand.vmem [shape: f32[16,8], index: 0, kind: input, shape index: {}]
  %s1 = inlined_call_operand.vmem [shape: f32[1,128], index: 1, kind: output, shape index: {}]
  $region1: #{tile.24} parent=0
    #allocation0 [shape = 'u8[4096]{0}', space=vmem, size = 0x1000, scoped, tag = 'scoped mem for output reshape']
    %v2 = vld [vmem:[%s0] sm:$0x1]
    %vm3 = vcmask 64512
    %4 = vst.msk [vmem:[#allocation0] sm:$0x1] %vm3, %v2
    %s5 = scalar_lea.vmem %s0, 15
    %v6 = vld [vmem:[%s5] sm:$0x1]
    %7 = vrot.lane.b32.xlu0 %v6, 120
    %v8 = vpop.permute.xlu0 %7
    %vm9 = vcmask 1048512
    %10 = vst.msk [vmem:[#allocation0] sm:$0x1] %vm9, %v8
    %s11 = scalar_lea.vmem %s0, 14
    %v12 = vld [vmem:[%s11] sm:$0x1]
    %13 = vrot.lane.b32.xlu0 %v12, 112
    %v14 = vpop.permute.xlu0 %13
    %vm15 = vcmask 982912
    %16 = vst.msk [vmem:[#allocation0] sm:$0x1] %vm15, %v14
    %s17 = scalar_lea.vmem %s0, 13
    %v18 = vld [vmem:[%s17] sm:$0x1]
    %19 = vrot.lane.b32.xlu0 %v18, 104
    %v20 = vpop.permute.xlu0 %19
    %vm21 = vcmask 917312
    %22 = vst.msk [vmem:[#allocation0] sm:$0x1] %vm21, %v20
    %s23 = scalar_lea.vmem %s0, 12
    %v24 = vld [vmem:[%s23] sm:$0x1]
    %25 = vrot.lane.b32.xlu0 %v24, 96
    %v26 = vpop.permute.xlu0 %25
    %vm27 = vcmask 851712
    %28 = vst.msk [vmem:[#allocation0] sm:$0x1] %vm27, %v26
    %s29 = scalar_lea.vmem %s0, 11
    %v30 = vld [vmem:[%s29] sm:$0x1]
    %31 = vrot.lane.b32.xlu0 %v30, 88
    %v32 = vpop.permute.xlu0 %31
    %vm33 = vcmask 786112
    %34 = vst.msk [vmem:[#allocation0] sm:$0x1] %vm33, %v32
    %s35 = scalar_lea.vmem %s0, 10
    %v36 = vld [vmem:[%s35] sm:$0x1]
    %37 = vrot.lane.b32.xlu0 %v36, 80
    %v38 = vpop.permute.xlu0 %37
    %vm39 = vcmask 720512
    %40 = vst.msk [vmem:[#allocation0] sm:$0x1] %vm39, %v38
    %s41 = scalar_lea.vmem %s0, 9
    %v42 = vld [vmem:[%s41] sm:$0x1]
    %43 = vrot.lane.b32.xlu0 %v42, 72
    %v44 = vpop.permute.xlu0 %43
    %vm45 = vcmask 654912
    %46 = vst.msk [vmem:[#allocation0] sm:$0x1] %vm45, %v44
    %s47 = scalar_lea.vmem %s0, 8
    %v48 = vld [vmem:[%s47] sm:$0x1]
    %49 = vrot.lane.b32.xlu0 %v48, 64
    %v50 = vpop.permute.xlu0 %49
    %vm51 = vcmask 589312
    %52 = vst.msk [vmem:[#allocation0] sm:$0x1] %vm51, %v50
    %s53 = scalar_lea.vmem %s0, 7
    %v54 = vld [vmem:[%s53] sm:$0x1]
    %55 = vrot.lane.b32.xlu0 %v54, 56
    %v56 = vpop.permute.xlu0 %55
    %vm57 = vcmask 523712
    %58 = vst.msk [vmem:[#allocation0] sm:$0x1] %vm57, %v56
    %s59 = scalar_lea.vmem %s0, 6
    %v60 = vld [vmem:[%s59] sm:$0x1]
    %61 = vrot.lane.b32.xlu0 %v60, 48
    %v62 = vpop.permute.xlu0 %61
    %vm63 = vcmask 458112
    %64 = vst.msk [vmem:[#allocation0] sm:$0x1] %vm63, %v62
    %s65 = scalar_lea.vmem %s0, 5
    %v66 = vld [vmem:[%s65] sm:$0x1]
    %67 = vrot.lane.b32.xlu0 %v66, 40
    %v68 = vpop.permute.xlu0 %67
    %vm69 = vcmask 392512
    %70 = vst.msk [vmem:[#allocation0] sm:$0x1] %vm69, %v68
    %s71 = scalar_lea.vmem %s0, 4
    %v72 = vld [vmem:[%s71] sm:$0x1]
    %73 = vrot.lane.b32.xlu0 %v72, 32
    %v74 = vpop.permute.xlu0 %73
    %vm75 = vcmask 326912
    %76 = vst.msk [vmem:[#allocation0] sm:$0x1] %vm75, %v74
    %s77 = scalar_lea.vmem %s0, 3
    %v78 = vld [vmem:[%s77] sm:$0x1]
    %79 = vrot.lane.b32.xlu0 %v78, 24
    %v80 = vpop.permute.xlu0 %79
    %vm81 = vcmask 261312
    %82 = vst.msk [vmem:[#allocation0] sm:$0x1] %vm81, %v80
    %s83 = scalar_lea.vmem %s0, 2
    %v84 = vld [vmem:[%s83] sm:$0x1]
    %85 = vrot.lane.b32.xlu0 %v84, 16
    %v86 = vpop.permute.xlu0 %85
    %vm87 = vcmask 195712
    %88 = vst.msk [vmem:[#allocation0] sm:$0x1] %vm87, %v86
    %s89 = scalar_lea.vmem %s0, 1
    %v90 = vld [vmem:[%s89] sm:$0x1]
    %91 = vrot.lane.b32.xlu0 %v90, 8
    %v92 = vpop.permute.xlu0 %91
    %vm93 = vcmask 130112
    %94 = vst.msk [vmem:[#allocation0] sm:$0x1] %vm93, %v92
    %s96 = sshll.u32 1, 1
    %s97 = ssub.s32 %s96, 1
    %v99 = vld [vmem:[#allocation0] sm:%s97]
    %s100 = sshll.u32 1, 1
    %s101 = ssub.s32 %s100, 1
    %102 = vst [vmem:[%s1] sm:%s101] %v99

// kernel: res_basic_block.3
$region0: #{res_basic_block.3}
  #allocation0 [shape = 'u32[]', space=smem, size = 0x4, offset = 0x4, fixed_abs, tag = 'smem constant byte address 0x4 - core index']
  #allocation1 [shape = 'u32[144,128]{1,0:T(1,128)}', space=vmem, size = 0x12000, scoped, tag = 'internal scratch']
  %s0 = inlined_call_operand.vmem [shape: bf16[2,16,128], index: 0, kind: input, shape index: {}]
  %s1 = inlined_call_operand.vmem [shape: bf16[3,128,128], index: 1, kind: input, shape index: {}]
  %s2 = inlined_call_operand.vmem [shape: bf16[2,16,128], index: 2, kind: output, shape index: {0}]
  %s3 = inlined_call_operand.vmem [shape: f32[2,1,2,128], index: 3, kind: output, shape index: {1}]
  %4 = xla_tuple %s2, %s3
  %s5 = sld [smem:[#allocation0]]
  $region49: #{res_basic_block.3} parent=0
    _
  %s7 = ssub.s32 1, %s5
  %s8 = scalar_select 0, %s7, %s5
  loop: start=0, step=1, limit=4
  $region2: #{res_basic_block.3} parent=0 // loop_pre_header
    _
  $region3: #{res_basic_block.3} parent=0 // loop_header
    %s10 = sphi 0, %s14
    %p11 = scmp.ge.s32.totalorder %s10, 4
    %s17 = sphi 0, %s29
    %s18 = sphi 0, %s25
    %s19 = sphi 0, %s17
    %s20 = sphi 0, %s18
    %s21 = sphi 0, %s19
    %s22 = sphi 0, %s20
    %s34 = sphi 0, %s36
    %s37 = sphi 0, %s34
    %s38 = sphi 0, %s37
    %s54 = sphi 0, %s38
    %s58 = sphi 0, %s58
    %s60 = sphi 0, %s58
    %s61 = sphi 0, %s60
    %s75 = sphi 0, %s61
    %s83 = sphi 0, %s85
    %s86 = sphi 0, %s83
    %s87 = sphi 0, %s86
    %s103 = sphi 0, %s87
    %s111 = sphi 0, %s113
    %s114 = sphi 0, %s111
    %s115 = sphi 0, %s114
    %s131 = sphi 0, %s115
  $region4: #{res_basic_block.3} parent=0 // loop_header_branch
    %13 = sbr.rel (%p11) target = $region8
  $region5: #{res_basic_block.3} parent=0 // loop_body
    %s15 = ssub.s32 %s10, 1
    %s16 = ssub.s32 %s10, 2
    %s23 = sadd.s32 1, %s18
    %p24 = scmp.ge.s32.totalorder %s23, 1
    %s25 = scalar_select %p24, 0, %s23
    %s26 = sadd.s32 1, %s17
    %s27 = scalar_select %p24, %s26, %s17
    %p28 = scmp.ge.s32.totalorder %s27, 2
    %s29 = scalar_select %p28, 0, %s27
    %s30 = ssub.s32 %s17, %s29
    %s31 = ssub.s32 %s18, %s25
    %s32 = sor.u32 %s30, %s31
    %p33 = scmp.eq.s32.totalorder %s32, 0
    %s35 = sadd.s32 %s34, 1
    %s36 = scalar_select %p33, %s34, %s35
    %p39 = pneg %p33
    %p40 = scmp.eq.s32.totalorder %s10, 1
    %p41 = por %p39, %p40
    %p42 = scmp.ne.s32.totalorder %s34, %s37
    %p43 = scmp.eq.s32.totalorder %s10, 0
    %p44 = por %p42, %p43
    %p45 = scmp.ne.s32.totalorder %s34, %s37
    %p46 = scmp.eq.s32.totalorder %s15, 1
    %p47 = por %p45, %p46
    %p48 = scmp.ne.s32.totalorder %s37, %s38
    %p49 = scmp.eq.s32.totalorder %s15, 0
    %p50 = por %p48, %p49
    %p51 = scmp.ne.s32.totalorder %s37, %s38
    %p52 = scmp.eq.s32.totalorder %s16, 1
    %p53 = por %p51, %p52
    %p55 = scmp.ne.s32.totalorder %s38, %s54
    %p56 = scmp.eq.s32.totalorder %s16, 0
    %p57 = por %p55, %p56
    %s59 = sadd.s32 %s58, 1
    %p62 = scmp.eq.s32.totalorder %s10, 1
    %p63 = scmp.ne.s32.totalorder %s58, %s60
    %p64 = scmp.eq.s32.totalorder %s10, 0
    %p65 = por %p63, %p64
    %p66 = scmp.ne.s32.totalorder %s58, %s60
    %p67 = scmp.eq.s32.totalorder %s15, 1
    %p68 = por %p66, %p67
    %p69 = scmp.ne.s32.totalorder %s60, %s61
    %p70 = scmp.eq.s32.totalorder %s15, 0
    %p71 = por %p69, %p70
    %p72 = scmp.ne.s32.totalorder %s60, %s61
    %p73 = scmp.eq.s32.totalorder %s16, 1
    %p74 = por %p72, %p73
    %p76 = scmp.ne.s32.totalorder %s61, %s75
    %p77 = scmp.eq.s32.totalorder %s16, 0
    %p78 = por %p76, %p77
    %s79 = ssub.s32 %s17, %s29
    %s80 = ssub.s32 %s18, %s25
    %s81 = sor.u32 %s79, %s80
    %p82 = scmp.eq.s32.totalorder %s81, 0
    %s84 = sadd.s32 %s83, 1
    %s85 = scalar_select %p82, %s83, %s84
    %p88 = pneg %p82
    %p89 = scmp.eq.s32.totalorder %s10, 1
    %p90 = por %p88, %p89
    %p91 = scmp.ne.s32.totalorder %s83, %s86
    %p92 = scmp.eq.s32.totalorder %s10, 0
    %p93 = por %p91, %p92
    %p94 = scmp.ne.s32.totalorder %s83, %s86
    %p95 = scmp.eq.s32.totalorder %s15, 1
    %p96 = por %p94, %p95
    %p97 = scmp.ne.s32.totalorder %s86, %s87
    %p98 = scmp.eq.s32.totalorder %s15, 0
    %p99 = por %p97, %p98
    %p100 = scmp.ne.s32.totalorder %s86, %s87
    %p101 = scmp.eq.s32.totalorder %s16, 1
    %p102 = por %p100, %p101
    %p104 = scmp.ne.s32.totalorder %s87, %s103
    %p105 = scmp.eq.s32.totalorder %s16, 0
    %p106 = por %p104, %p105
    %s107 = ssub.s32 %s17, %s29
    %s108 = ssub.s32 %s18, %s25
    %s109 = sor.u32 %s107, %s108
    %p110 = scmp.eq.s32.totalorder %s109, 0
    %s112 = sadd.s32 %s111, 1
    %s113 = scalar_select %p110, %s111, %s112
    %p116 = pneg %p110
    %p117 = scmp.eq.s32.totalorder %s10, 1
    %p118 = por %p116, %p117
    %p119 = scmp.ne.s32.totalorder %s111, %s114
    %p120 = scmp.eq.s32.totalorder %s10, 0
    %p121 = por %p119, %p120
    %p122 = scmp.ne.s32.totalorder %s111, %s114
    %p123 = scmp.eq.s32.totalorder %s15, 1
    %p124 = por %p122, %p123
    %p125 = scmp.ne.s32.totalorder %s114, %s115
    %p126 = scmp.eq.s32.totalorder %s15, 0
    %p127 = por %p125, %p126
    %p128 = scmp.ne.s32.totalorder %s114, %s115
    %p129 = scmp.eq.s32.totalorder %s16, 1
    %p130 = por %p128, %p129
    %p132 = scmp.ne.s32.totalorder %s115, %s131
    %p133 = scmp.eq.s32.totalorder %s16, 0
    %p134 = por %p132, %p133
    %p135 = scmp.le.s32.totalorder 1, %s10
    %p136 = scmp.lt.s32.totalorder %s10, 3
    %p137 = pnand %p135, %p136
    %p138 = pneg %p137
    // Predicated region
    $region9: #{res_basic_block.3} parent=5 // pred_check
      _
    $region10: #{res_basic_block.3} parent=5 // pred_check_branch
      %140 = sbr.rel (%p137) target = $region12
    $region11: #{res_basic_block.3} parent=5 // pred_region
      %s141 = ssub.s32 %s10, 1
      // Predicated region
      $region13: #{res_basic_block.3} parent=11 // pred_check
        %p142 = pneg %p71
      $region14: #{res_basic_block.3} parent=11 // pred_check_branch
        %144 = sbr.rel (%p142) target = $region16
      $region15: #{res_basic_block.3} parent=11 // pred_region
        _
      $region16: #{res_basic_block.3} parent=11 // pred_fallthru
        _
    $region12: #{res_basic_block.3} parent=5 // pred_fallthru
      _
    %p145 = scmp.lt.s32.totalorder %s10, 2
    // Predicated region
    $region17: #{res_basic_block.3} parent=5 // pred_check
      %p146 = pneg %p145
    $region18: #{res_basic_block.3} parent=5 // pred_check_branch
      %148 = sbr.rel (%p146) target = $region20
    $region19: #{res_basic_block.3} parent=5 // pred_region
      // Predicated region
      $region21: #{res_basic_block.3} parent=19 // pred_check
        %p149 = pneg %p44
      $region22: #{res_basic_block.3} parent=19 // pred_check_branch
        %151 = sbr.rel (%p149) target = $region24
      $region23: #{res_basic_block.3} parent=19 // pred_region
        %s152 = smul.u32 2, %s18
        %p153 = scmp.lt.s32.totalorder %s17, 1
        %s154 = scalar_select %p153, %s17, 1
        %p155 = scmp.lt.s32.totalorder %s152, 1
        %s156 = scalar_select %p155, %s152, 1
        %s157 = smul.addr %s154, 2
        %s158 = sadd.s32 %s156, %s157
        %s159 = smul.addr %s158, 4
        %s160 = scalar_lea.vmem %s0, %s159
        %s161 = smul.u32 2, %s18
      $region24: #{res_basic_block.3} parent=19 // pred_fallthru
        _
    $region20: #{res_basic_block.3} parent=5 // pred_fallthru
      _
    %p162 = scmp.le.s32.totalorder 1, %s10
    %p163 = scmp.lt.s32.totalorder %s10, 3
    %p164 = pnand %p162, %p163
    %p165 = pneg %p164
    // Predicated region
    $region25: #{res_basic_block.3} parent=5 // pred_check
      _
    $region26: #{res_basic_block.3} parent=5 // pred_check_branch
      %167 = sbr.rel (%p164) target = $region28
    $region27: #{res_basic_block.3} parent=5 // pred_region
      %s168 = ssub.s32 %s10, 1
      %s169 = smul.u32 2, %s20
      %p170 = scmp.lt.s32.totalorder %s19, 1
      %s171 = scalar_select %p170, %s19, 1
      %p172 = scmp.lt.s32.totalorder %s169, 1
      %s173 = scalar_select %p172, %s169, 1
      %s174 = smul.addr %s171, 2
      %s175 = sadd.s32 %s173, %s174
      %s176 = smul.addr %s175, 4
      %s177 = scalar_lea.vmem %s0, %s176
      %p178 = pneg %p50
      %p179 = pneg %p47
      %p180 = pneg %p71
      %p181 = pneg %p68
      %p182 = pneg %p99
      %p183 = pneg %p96
      %s184 = smul.u32 2, %s20
      %p185 = scmp.lt.s32.totalorder %s19, 1
      %s186 = scalar_select %p185, %s19, 1
      %p187 = scmp.lt.s32.totalorder %s184, 1
      %s188 = scalar_select %p187, %s184, 1
      %s189 = smul.addr %s186, 2
      %s190 = sadd.s32 %s188, %s189
      %s191 = smul.addr %s190, 4
      %s192 = scalar_lea.vmem %s2, %s191
      %p193 = pneg %p127
      %p194 = pneg %p124
      %p195 = scmp.lt.s32.totalorder %s19, 1
      %s196 = scalar_select %p195, %s19, 1
      %p197 = scmp.lt.s32.totalorder %s20, 0
      %s198 = scalar_select %p197, %s20, 0
      %s199 = sadd.s32 %s198, %s196
      %s200 = smul.addr %s199, 2
      %s201 = scalar_lea.vmem %s3, %s200
      %s202 = smul.u32 2, %s20
      %p203 = scmp.lt.s32.totalorder %s19, 1
      %s204 = scalar_select %p203, %s19, 1
      %p205 = scmp.lt.s32.totalorder %s202, 1
      %s206 = scalar_select %p205, %s202, 1
      %s207 = smul.addr %s204, 2
      %s208 = sadd.s32 %s206, %s207
      %s209 = smul.addr %s208, 4
      %s210 = scalar_lea.vmem %s0, %s209
      %s211 = smul.u32 2, %s20
      %s212 = smul.u32 2, %s20
      %p213 = scmp.lt.s32.totalorder %s19, 1
      %s214 = scalar_select %p213, %s19, 1
      %p215 = scmp.lt.s32.totalorder %s212, 1
      %s216 = scalar_select %p215, %s212, 1
      %s217 = smul.addr %s214, 2
      %s218 = sadd.s32 %s216, %s217
      %s219 = smul.addr %s218, 4
      %s220 = scalar_lea.vmem %s2, %s219
      %s221 = smul.u32 2, %s20
      %p222 = scmp.lt.s32.totalorder %s19, 1
      %s223 = scalar_select %p222, %s19, 1
      %p224 = scmp.lt.s32.totalorder %s20, 0
      %s225 = scalar_select %p224, %s20, 0
      %s226 = sadd.s32 %s225, %s223
      %s227 = smul.addr %s226, 2
      %s228 = scalar_lea.vmem %s3, %s227
      %v230 = vld [vmem:[%s210] sm:$0xf]
      %v231 = vld [vmem:[%s210 + $0x4] sm:$0xf]
      %v234 = vunpack.c.l.b16 %v230
      %v235 = vunpack.c.l.b16 %v231
      %v236 = vpack.c.b16 %v235, %v234
      %v238 = vshrl.u32 %v236, 16
      %v240 = vrot.slane %v238, 7
      %v241 = vshll.u32 %v236, 16
      %v243 = vor.u32 %v240, %v241
      %vm245 = vcmask 1040384
      %vm246 = vsmask.f32 256
      %vm247 = vmand %vm245, %vm246
      %v248 = vsel %vm247, 0, %v243
      %v249 = vrot.slane %v241, 1
      %v250 = vor.u32 %v238, %v249
      %vm252 = vcmask 1047552
      %vm253 = vsmask.f32 7424
      %vm254 = vmand %vm252, %vm253
      %v255 = vsel %vm254, %v250, 0
      %s256 = scalar_lea.vmem %s1, 64
      %v257 = vld [vmem:[%s256] sm:$0xf]
      %v258 = vld [vmem:[%s256 + $0x4] sm:$0xf]
      %v259 = vld [vmem:[%s256 + $0x8] sm:$0xf]
      %v260 = vld [vmem:[%s256 + $0xc] sm:$0xf]
      %v261 = vld [vmem:[%s256 + $0x10] sm:$0xf]
      %v262 = vld [vmem:[%s256 + $0x14] sm:$0xf]
      %v263 = vld [vmem:[%s256 + $0x18] sm:$0xf]
      %v264 = vld [vmem:[%s256 + $0x1c] sm:$0xf]
      %v265 = vld [vmem:[%s256 + $0x20] sm:$0xf]
      %v266 = vld [vmem:[%s256 + $0x24] sm:$0xf]
      %v267 = vld [vmem:[%s256 + $0x28] sm:$0xf]
      %v268 = vld [vmem:[%s256 + $0x2c] sm:$0xf]
      %v269 = vld [vmem:[%s256 + $0x30] sm:$0xf]
      %v270 = vld [vmem:[%s256 + $0x34] sm:$0xf]
      %v271 = vld [vmem:[%s256 + $0x38] sm:$0xf]
      %v272 = vld [vmem:[%s256 + $0x3c] sm:$0xf]
      %v273 = vld [vmem:[%s1] sm:$0xf]
      %v274 = vld [vmem:[%s1 + $0x4] sm:$0xf]
      %v275 = vld [vmem:[%s1 + $0x8] sm:$0xf]
      %v276 = vld [vmem:[%s1 + $0xc] sm:$0xf]
      %v277 = vld [vmem:[%s1 + $0x10] sm:$0xf]
      %v278 = vld [vmem:[%s1 + $0x14] sm:$0xf]
      %v279 = vld [vmem:[%s1 + $0x18] sm:$0xf]
      %v280 = vld [vmem:[%s1 + $0x1c] sm:$0xf]
      %v281 = vld [vmem:[%s1 + $0x20] sm:$0xf]
      %v282 = vld [vmem:[%s1 + $0x24] sm:$0xf]
      %v283 = vld [vmem:[%s1 + $0x28] sm:$0xf]
      %v284 = vld [vmem:[%s1 + $0x2c] sm:$0xf]
      %v285 = vld [vmem:[%s1 + $0x30] sm:$0xf]
      %v286 = vld [vmem:[%s1 + $0x34] sm:$0xf]
      %v287 = vld [vmem:[%s1 + $0x38] sm:$0xf]
      %v288 = vld [vmem:[%s1 + $0x3c] sm:$0xf]
      %v305 = vunpack.c.l.b16 %v273
      %v306 = vunpack.c.l.b16 %v274
      %v307 = vunpack.c.l.b16 %v275
      %v308 = vunpack.c.l.b16 %v276
      %v309 = vunpack.c.l.b16 %v277
      %v310 = vunpack.c.l.b16 %v278
      %v311 = vunpack.c.l.b16 %v279
      %v312 = vunpack.c.l.b16 %v280
      %v313 = vunpack.c.l.b16 %v281
      %v314 = vunpack.c.l.b16 %v282
      %v315 = vunpack.c.l.b16 %v283
      %v316 = vunpack.c.l.b16 %v284
      %v317 = vunpack.c.l.b16 %v285
      %v318 = vunpack.c.l.b16 %v286
      %v319 = vunpack.c.l.b16 %v287
      %v320 = vunpack.c.l.b16 %v288
      %v321 = vpack.c.b16 %v306, %v305
      %v322 = vpack.c.b16 %v308, %v307
      %v323 = vpack.c.b16 %v310, %v309
      %v324 = vpack.c.b16 %v312, %v311
      %v325 = vpack.c.b16 %v314, %v313
      %v326 = vpack.c.b16 %v316, %v315
      %v327 = vpack.c.b16 %v318, %v317
      %v328 = vpack.c.b16 %v320, %v319
      %337 = vmatprep.subr.bf16.mxu0 0
      %338 = vmatpush1.bf16.msra.mxu0 %v328
      %339 = vmatprep.subr.bf16.mxu0 0
      %340 = vmatpush1.bf16.msra.mxu0 %v327
      %341 = vmatprep.subr.bf16.mxu0 0
      %342 = vmatpush1.bf16.msra.mxu0 %v326
      %343 = vmatprep.subr.bf16.mxu0 0
      %344 = vmatpush1.bf16.msra.mxu0 %v325
      %345 = vmatprep.subr.bf16.mxu0 0
      %346 = vmatpush1.bf16.msra.mxu0 %v324
      %347 = vmatprep.subr.bf16.mxu0 0
      %348 = vmatpush1.bf16.msra.mxu0 %v323
      %349 = vmatprep.subr.bf16.mxu0 0
      %350 = vmatpush1.bf16.msra.mxu0 %v322
      %351 = vmatprep.subr.bf16.mxu0 0
      %352 = vmatpush1.bf16.msra.mxu0 %v321
      %353 = vmatprep.subr.bf16.mxu0 0
      %354 = vmatpush2.bf16.msra.mxu0 0
      %355 = vmatprep.subr.bf16.mxu0 0
      %356 = vmatpush2.bf16.msra.mxu0 0
      %357 = vmatprep.subr.bf16.mxu0 0
      %358 = vmatpush2.bf16.msra.mxu0 0
      %359 = vmatprep.subr.bf16.mxu0 0
      %360 = vmatpush2.bf16.msra.mxu0 0
      %361 = vmatprep.subr.bf16.mxu0 0
      %362 = vmatpush2.bf16.msra.mxu0 0
      %363 = vmatprep.subr.bf16.mxu0 0
      %364 = vmatpush2.bf16.msra.mxu0 0
      %365 = vmatprep.subr.bf16.mxu0 0
      %366 = vmatpush2.bf16.msra.mxu0 0
      %367 = vmatprep.subr.bf16.mxu0 0
      %368 = vmatpush2.bf16.msra.mxu0 0
      %369 = vmatprep.mubr.bf16.mxu0 0
      %370 = vmatmul.mubr.bf16.gmra.mxu0 %v248
      %v371 = vpop.f32.mrf.mxu0
      %v372 = vadd.f32 0.0, %v371
      %v373 = vpop.f32.mrf.mxu0
      %v374 = vpop.f32.mrf.mxu0
      %v375 = vadd.f32 0.0, %v374
      %v376 = vpop.f32.mrf.mxu0
      %377 = vdwg.mxu0
      %v395 = vunpack.c.l.b16 %v257
      %v396 = vunpack.c.l.b16 %v258
      %v397 = vunpack.c.l.b16 %v259
      %v398 = vunpack.c.l.b16 %v260
      %v399 = vunpack.c.l.b16 %v261
      %v400 = vunpack.c.l.b16 %v262
      %v401 = vunpack.c.l.b16 %v263
      %v402 = vunpack.c.l.b16 %v264
      %v403 = vunpack.c.l.b16 %v265
      %v404 = vunpack.c.l.b16 %v266
      %v405 = vunpack.c.l.b16 %v267
      %v406 = vunpack.c.l.b16 %v268
      %v407 = vunpack.c.l.b16 %v269
      %v408 = vunpack.c.l.b16 %v270
      %v409 = vunpack.c.l.b16 %v271
      %v410 = vunpack.c.l.b16 %v272
      %v411 = vpack.c.b16 %v396, %v395
      %v412 = vpack.c.b16 %v398, %v397
      %v413 = vpack.c.b16 %v400, %v399
      %v414 = vpack.c.b16 %v402, %v401
      %v415 = vpack.c.b16 %v404, %v403
      %v416 = vpack.c.b16 %v406, %v405
      %v417 = vpack.c.b16 %v408, %v407
      %v418 = vpack.c.b16 %v410, %v409
      %427 = vmatprep.subr.bf16.mxu0 0
      %428 = vmatpush1.bf16.msra.mxu0 %v418
      %429 = vmatprep.subr.bf16.mxu0 0
      %430 = vmatpush1.bf16.msra.mxu0 %v417
      %431 = vmatprep.subr.bf16.mxu0 0
      %432 = vmatpush1.bf16.msra.mxu0 %v416
      %433 = vmatprep.subr.bf16.mxu0 0
      %434 = vmatpush1.bf16.msra.mxu0 %v415
      %435 = vmatprep.subr.bf16.mxu0 0
      %436 = vmatpush1.bf16.msra.mxu0 %v414
      %437 = vmatprep.subr.bf16.mxu0 0
      %438 = vmatpush1.bf16.msra.mxu0 %v413
      %439 = vmatprep.subr.bf16.mxu0 0
      %440 = vmatpush1.bf16.msra.mxu0 %v412
      %441 = vmatprep.subr.bf16.mxu0 0
      %442 = vmatpush1.bf16.msra.mxu0 %v411
      %443 = vmatprep.subr.bf16.mxu0 0
      %444 = vmatpush2.bf16.msra.mxu0 0
      %445 = vmatprep.subr.bf16.mxu0 0
      %446 = vmatpush2.bf16.msra.mxu0 0
      %447 = vmatprep.subr.bf16.mxu0 0
      %448 = vmatpush2.bf16.msra.mxu0 0
      %449 = vmatprep.subr.bf16.mxu0 0
      %450 = vmatpush2.bf16.msra.mxu0 0
      %451 = vmatprep.subr.bf16.mxu0 0
      %452 = vmatpush2.bf16.msra.mxu0 0
      %453 = vmatprep.subr.bf16.mxu0 0
      %454 = vmatpush2.bf16.msra.mxu0 0
      %455 = vmatprep.subr.bf16.mxu0 0
      %456 = vmatpush2.bf16.msra.mxu0 0
      %457 = vmatprep.subr.bf16.mxu0 0
      %458 = vmatpush2.bf16.msra.mxu0 0
      %459 = vmatprep.mubr.bf16.mxu0 0
      %460 = vmatmul.mubr.bf16.gmra.mxu0 %v236
      %v461 = vpop.f32.mrf.mxu0
      %v462 = vadd.f32 %v372, %v461
      %v463 = vpop.f32.mrf.mxu0
      %v464 = vpop.f32.mrf.mxu0
      %v465 = vadd.f32 %v375, %v464
      %v466 = vpop.f32.mrf.mxu0
      %467 = vdwg.mxu0
      %s468 = scalar_lea.vmem %s1, 128
      %v469 = vld [vmem:[%s468] sm:$0xf]
      %v470 = vld [vmem:[%s468 + $0x4] sm:$0xf]
      %v471 = vld [vmem:[%s468 + $0x8] sm:$0xf]
      %v472 = vld [vmem:[%s468 + $0xc] sm:$0xf]
      %v473 = vld [vmem:[%s468 + $0x10] sm:$0xf]
      %v474 = vld [vmem:[%s468 + $0x14] sm:$0xf]
      %v475 = vld [vmem:[%s468 + $0x18] sm:$0xf]
      %v476 = vld [vmem:[%s468 + $0x1c] sm:$0xf]
      %v477 = vld [vmem:[%s468 + $0x20] sm:$0xf]
      %v478 = vld [vmem:[%s468 + $0x24] sm:$0xf]
      %v479 = vld [vmem:[%s468 + $0x28] sm:$0xf]
      %v480 = vld [vmem:[%s468 + $0x2c] sm:$0xf]
      %v481 = vld [vmem:[%s468 + $0x30] sm:$0xf]
      %v482 = vld [vmem:[%s468 + $0x34] sm:$0xf]
      %v483 = vld [vmem:[%s468 + $0x38] sm:$0xf]
      %v484 = vld [vmem:[%s468 + $0x3c] sm:$0xf]
      %v501 = vunpack.c.l.b16 %v469
      %v502 = vunpack.c.l.b16 %v470
      %v503 = vunpack.c.l.b16 %v471
      %v504 = vunpack.c.l.b16 %v472
      %v505 = vunpack.c.l.b16 %v473
      %v506 = vunpack.c.l.b16 %v474
      %v507 = vunpack.c.l.b16 %v475
      %v508 = vunpack.c.l.b16 %v476
      %v509 = vunpack.c.l.b16 %v477
      %v510 = vunpack.c.l.b16 %v478
      %v511 = vunpack.c.l.b16 %v479
      %v512 = vunpack.c.l.b16 %v480
      %v513 = vunpack.c.l.b16 %v481
      %v514 = vunpack.c.l.b16 %v482
      %v515 = vunpack.c.l.b16 %v483
      %v516 = vunpack.c.l.b16 %v484
      %v517 = vpack.c.b16 %v502, %v501
      %v518 = vpack.c.b16 %v504, %v503
      %v519 = vpack.c.b16 %v506, %v505
      %v520 = vpack.c.b16 %v508, %v507
      %v521 = vpack.c.b16 %v510, %v509
      %v522 = vpack.c.b16 %v512, %v511
      %v523 = vpack.c.b16 %v514, %v513
      %v524 = vpack.c.b16 %v516, %v515
      %533 = vmatprep.subr.bf16.mxu0 0
      %534 = vmatpush1.bf16.msra.mxu0 %v524
      %535 = vmatprep.subr.bf16.mxu0 0
      %536 = vmatpush1.bf16.msra.mxu0 %v523
      %537 = vmatprep.subr.bf16.mxu0 0
      %538 = vmatpush1.bf16.msra.mxu0 %v522
      %539 = vmatprep.subr.bf16.mxu0 0
      %540 = vmatpush1.bf16.msra.mxu0 %v521
      %541 = vmatprep.subr.bf16.mxu0 0
      %542 = vmatpush1.bf16.msra.mxu0 %v520
      %543 = vmatprep.subr.bf16.mxu0 0
      %544 = vmatpush1.bf16.msra.mxu0 %v519
      %545 = vmatprep.subr.bf16.mxu0 0
      %546 = vmatpush1.bf16.msra.mxu0 %v518
      %547 = vmatprep.subr.bf16.mxu0 0
      %548 = vmatpush1.bf16.msra.mxu0 %v517
      %549 = vmatprep.subr.bf16.mxu0 0
      %550 = vmatpush2.bf16.msra.mxu0 0
      %551 = vmatprep.subr.bf16.mxu0 0
      %552 = vmatpush2.bf16.msra.mxu0 0
      %553 = vmatprep.subr.bf16.mxu0 0
      %554 = vmatpush2.bf16.msra.mxu0 0
      %555 = vmatprep.subr.bf16.mxu0 0
      %556 = vmatpush2.bf16.msra.mxu0 0
      %557 = vmatprep.subr.bf16.mxu0 0
      %558 = vmatpush2.bf16.msra.mxu0 0
      %559 = vmatprep.subr.bf16.mxu0 0
      %560 = vmatpush2.bf16.msra.mxu0 0
      %561 = vmatprep.subr.bf16.mxu0 0
      %562 = vmatpush2.bf16.msra.mxu0 0
      %563 = vmatprep.subr.bf16.mxu0 0
      %564 = vmatpush2.bf16.msra.mxu0 0
      %565 = vmatprep.mubr.bf16.mxu0 0
      %566 = vmatmul.mubr.bf16.gmra.mxu0 %v255
      %v567 = vpop.f32.mrf.mxu0
      %v568 = vadd.f32 0.0, %v567
      %v569 = vpop.f32.mrf.mxu0
      %v570 = vpop.f32.mrf.mxu0
      %v571 = vadd.f32 0.0, %v570
      %v572 = vpop.f32.mrf.mxu0
      %573 = vdwg.mxu0
      %v574 = vadd.f32 %v462, %v568
      %v575 = vadd.f32 %v465, %v571
      %v576 = vpack.c.bf16 %v575, %v574
      %v578 = vunpack.c.l.b16 %v576
      %v579 = vunpack.c.h.b16 %v576
      %v580 = vpack.c.b16 %v578, %v578
      %v581 = vpack.c.b16 %v579, %v579
      %584 = vst [vmem:[%s220] sm:$0xf] %v580
      %585 = vst [vmem:[%s220 + $0x4] sm:$0xf] %v581
      %v586 = vunpack.c.l.bf16 %v576
      %v587 = vunpack.c.h.bf16 %v576
      %v588 = vadd.f32 %v586, %v587
      %v589 = vrot.slane %v588, 4
      %v590 = vadd.f32 %v588, %v589
      %v591 = vrot.slane %v590, 2
      %v592 = vadd.f32 %v590, %v591
      %v593 = vrot.slane %v592, 1
      %v594 = vadd.f32 %v592, %v593
      %v595 = vmul.f32 %v586, %v586
      %v596 = vmul.f32 %v587, %v587
      %v597 = vadd.f32 %v595, %v596
      %v598 = vrot.slane %v597, 4
      %v599 = vadd.f32 %v597, %v598
      %v600 = vrot.slane %v599, 2
      %v601 = vadd.f32 %v599, %v600
      %v602 = vrot.slane %v601, 1
      %v603 = vadd.f32 %v601, %v602
      %vm604 = vcmask 1040384
      %v605 = vsel %vm604, %v594, %v603
      %606 = vst [vmem:[%s228] sm:$0x3] %v605
      %s607 = smul.u32 2, %s20
      %p608 = scmp.lt.s32.totalorder %s19, 1
      %s609 = scalar_select %p608, %s19, 1
      %p610 = scmp.lt.s32.totalorder %s607, 1
      %s611 = scalar_select %p610, %s607, 1
      %s612 = smul.addr %s609, 2
      %s613 = sadd.s32 %s611, %s612
      %s614 = smul.addr %s613, 4
      %s615 = scalar_lea.vmem %s2, %s614
      %p616 = scmp.lt.s32.totalorder %s19, 1
      %s617 = scalar_select %p616, %s19, 1
      %p618 = scmp.lt.s32.totalorder %s20, 0
      %s619 = scalar_select %p618, %s20, 0
      %s620 = sadd.s32 %s619, %s617
      %s621 = smul.addr %s620, 2
      %s622 = scalar_lea.vmem %s3, %s621
      // Predicated region
      $region29: #{res_basic_block.3} parent=27 // pred_check
        %p623 = pneg %p96
      $region30: #{res_basic_block.3} parent=27 // pred_check_branch
        %625 = sbr.rel (%p623) target = $region32
      $region31: #{res_basic_block.3} parent=27 // pred_region
        %s626 = smul.u32 2, %s20
      $region32: #{res_basic_block.3} parent=27 // pred_fallthru
        _
      // Predicated region
      $region33: #{res_basic_block.3} parent=27 // pred_check
        %p627 = pneg %p124
      $region34: #{res_basic_block.3} parent=27 // pred_check_branch
        %629 = sbr.rel (%p627) target = $region36
      $region35: #{res_basic_block.3} parent=27 // pred_region
        _
      $region36: #{res_basic_block.3} parent=27 // pred_fallthru
        _
    $region28: #{res_basic_block.3} parent=5 // pred_fallthru
      _
    %p630 = scmp.le.s32.totalorder 2, %s10
    // Predicated region
    $region37: #{res_basic_block.3} parent=5 // pred_check
      %p631 = pneg %p630
    $region38: #{res_basic_block.3} parent=5 // pred_check_branch
      %633 = sbr.rel (%p631) target = $region40
    $region39: #{res_basic_block.3} parent=5 // pred_region
      %s634 = ssub.s32 %s10, 2
      // Predicated region
      $region41: #{res_basic_block.3} parent=39 // pred_check
        %p635 = pneg %p102
      $region42: #{res_basic_block.3} parent=39 // pred_check_branch
        %637 = sbr.rel (%p635) target = $region44
      $region43: #{res_basic_block.3} parent=39 // pred_region
        %s638 = smul.u32 2, %s22
        %p639 = scmp.lt.s32.totalorder %s21, 1
        %s640 = scalar_select %p639, %s21, 1
        %p641 = scmp.lt.s32.totalorder %s638, 1
        %s642 = scalar_select %p641, %s638, 1
        %s643 = smul.addr %s640, 2
        %s644 = sadd.s32 %s642, %s643
        %s645 = smul.addr %s644, 4
        %s646 = scalar_lea.vmem %s2, %s645
      $region44: #{res_basic_block.3} parent=39 // pred_fallthru
        _
      // Predicated region
      $region45: #{res_basic_block.3} parent=39 // pred_check
        %p647 = pneg %p130
      $region46: #{res_basic_block.3} parent=39 // pred_check_branch
        %649 = sbr.rel (%p647) target = $region48
      $region47: #{res_basic_block.3} parent=39 // pred_region
        %p650 = scmp.lt.s32.totalorder %s21, 1
        %s651 = scalar_select %p650, %s21, 1
        %p652 = scmp.lt.s32.totalorder %s22, 0
        %s653 = scalar_select %p652, %s22, 0
        %s654 = sadd.s32 %s653, %s651
        %s655 = smul.addr %s654, 2
        %s656 = scalar_lea.vmem %s3, %s655
      $region48: #{res_basic_block.3} parent=39 // pred_fallthru
        _
    $region40: #{res_basic_block.3} parent=5 // pred_fallthru
      _
  $region6: #{res_basic_block.3} parent=0 // loop_footer
    %s14 = sadd.s32 1, %s10
  $region7: #{res_basic_block.3} parent=0 // loop_footer_branch
    %9 = sbr.rel target = $region3
  $region8: #{res_basic_block.3} parent=0 // loop_exit
    _

// kernel: res_basic_block.4
$region0: #{res_basic_block.4}
  #allocation0 [shape = 'u32[]', space=smem, size = 0x4, offset = 0x4, fixed_abs, tag = 'smem constant byte address 0x4 - core index']
  #allocation1 [shape = 'u32[144,128]{1,0:T(1,128)}', space=vmem, size = 0x12000, scoped, tag = 'internal scratch']
  %s0 = inlined_call_operand.vmem [shape: bf16[2,16,128], index: 0, kind: input, shape index: {}]
  %s1 = inlined_call_operand.vmem [shape: bf16[3,128,128], index: 1, kind: input, shape index: {}]
  %s2 = inlined_call_operand.vmem [shape: f32[1,128], index: 2, kind: input, shape index: {}]
  %s3 = inlined_call_operand.vmem [shape: f32[1,128], index: 3, kind: input, shape index: {}]
  %s4 = inlined_call_operand.vmem [shape: bf16[2,16,128], index: 4, kind: output, shape index: {0}]
  %s5 = inlined_call_operand.vmem [shape: f32[2,1,2,128], index: 5, kind: output, shape index: {1}]
  %6 = xla_tuple %s4, %s5
  %s7 = sld [smem:[#allocation0]]
  $region57: #{res_basic_block.4} parent=0
    _
  %s9 = ssub.s32 1, %s7
  %s10 = scalar_select 0, %s9, %s7
  loop: start=0, step=1, limit=4
  $region2: #{res_basic_block.4} parent=0 // loop_pre_header
    _
  $region3: #{res_basic_block.4} parent=0 // loop_header
    %s12 = sphi 0, %s16
    %p13 = scmp.ge.s32.totalorder %s12, 4
    %s19 = sphi 0, %s31
    %s20 = sphi 0, %s27
    %s21 = sphi 0, %s19
    %s22 = sphi 0, %s20
    %s23 = sphi 0, %s21
    %s24 = sphi 0, %s22
    %s36 = sphi 0, %s38
    %s39 = sphi 0, %s36
    %s40 = sphi 0, %s39
    %s56 = sphi 0, %s40
    %s60 = sphi 0, %s60
    %s62 = sphi 0, %s60
    %s63 = sphi 0, %s62
    %s77 = sphi 0, %s63
    %s81 = sphi 0, %s81
    %s83 = sphi 0, %s81
    %s84 = sphi 0, %s83
    %s98 = sphi 0, %s84
    %s102 = sphi 0, %s102
    %s104 = sphi 0, %s102
    %s105 = sphi 0, %s104
    %s119 = sphi 0, %s105
    %s127 = sphi 0, %s129
    %s130 = sphi 0, %s127
    %s131 = sphi 0, %s130
    %s147 = sphi 0, %s131
    %s155 = sphi 0, %s157
    %s158 = sphi 0, %s155
    %s159 = sphi 0, %s158
    %s175 = sphi 0, %s159
  $region4: #{res_basic_block.4} parent=0 // loop_header_branch
    %15 = sbr.rel (%p13) target = $region8
  $region5: #{res_basic_block.4} parent=0 // loop_body
    %s17 = ssub.s32 %s12, 1
    %s18 = ssub.s32 %s12, 2
    %s25 = sadd.s32 1, %s20
    %p26 = scmp.ge.s32.totalorder %s25, 1
    %s27 = scalar_select %p26, 0, %s25
    %s28 = sadd.s32 1, %s19
    %s29 = scalar_select %p26, %s28, %s19
    %p30 = scmp.ge.s32.totalorder %s29, 2
    %s31 = scalar_select %p30, 0, %s29
    %s32 = ssub.s32 %s19, %s31
    %s33 = ssub.s32 %s20, %s27
    %s34 = sor.u32 %s32, %s33
    %p35 = scmp.eq.s32.totalorder %s34, 0
    %s37 = sadd.s32 %s36, 1
    %s38 = scalar_select %p35, %s36, %s37
    %p41 = pneg %p35
    %p42 = scmp.eq.s32.totalorder %s12, 1
    %p43 = por %p41, %p42
    %p44 = scmp.ne.s32.totalorder %s36, %s39
    %p45 = scmp.eq.s32.totalorder %s12, 0
    %p46 = por %p44, %p45
    %p47 = scmp.ne.s32.totalorder %s36, %s39
    %p48 = scmp.eq.s32.totalorder %s17, 1
    %p49 = por %p47, %p48
    %p50 = scmp.ne.s32.totalorder %s39, %s40
    %p51 = scmp.eq.s32.totalorder %s17, 0
    %p52 = por %p50, %p51
    %p53 = scmp.ne.s32.totalorder %s39, %s40
    %p54 = scmp.eq.s32.totalorder %s18, 1
    %p55 = por %p53, %p54
    %p57 = scmp.ne.s32.totalorder %s40, %s56
    %p58 = scmp.eq.s32.totalorder %s18, 0
    %p59 = por %p57, %p58
    %s61 = sadd.s32 %s60, 1
    %p64 = scmp.eq.s32.totalorder %s12, 1
    %p65 = scmp.ne.s32.totalorder %s60, %s62
    %p66 = scmp.eq.s32.totalorder %s12, 0
    %p67 = por %p65, %p66
    %p68 = scmp.ne.s32.totalorder %s60, %s62
    %p69 = scmp.eq.s32.totalorder %s17, 1
    %p70 = por %p68, %p69
    %p71 = scmp.ne.s32.totalorder %s62, %s63
    %p72 = scmp.eq.s32.totalorder %s17, 0
    %p73 = por %p71, %p72
    %p74 = scmp.ne.s32.totalorder %s62, %s63
    %p75 = scmp.eq.s32.totalorder %s18, 1
    %p76 = por %p74, %p75
    %p78 = scmp.ne.s32.totalorder %s63, %s77
    %p79 = scmp.eq.s32.totalorder %s18, 0
    %p80 = por %p78, %p79
    %s82 = sadd.s32 %s81, 1
    %p85 = scmp.eq.s32.totalorder %s12, 1
    %p86 = scmp.ne.s32.totalorder %s81, %s83
    %p87 = scmp.eq.s32.totalorder %s12, 0
    %p88 = por %p86, %p87
    %p89 = scmp.ne.s32.totalorder %s81, %s83
    %p90 = scmp.eq.s32.totalorder %s17, 1
    %p91 = por %p89, %p90
    %p92 = scmp.ne.s32.totalorder %s83, %s84
    %p93 = scmp.eq.s32.totalorder %s17, 0
    %p94 = por %p92, %p93
    %p95 = scmp.ne.s32.totalorder %s83, %s84
    %p96 = scmp.eq.s32.totalorder %s18, 1
    %p97 = por %p95, %p96
    %p99 = scmp.ne.s32.totalorder %s84, %s98
    %p100 = scmp.eq.s32.totalorder %s18, 0
    %p101 = por %p99, %p100
    %s103 = sadd.s32 %s102, 1
    %p106 = scmp.eq.s32.totalorder %s12, 1
    %p107 = scmp.ne.s32.totalorder %s102, %s104
    %p108 = scmp.eq.s32.totalorder %s12, 0
    %p109 = por %p107, %p108
    %p110 = scmp.ne.s32.totalorder %s102, %s104
    %p111 = scmp.eq.s32.totalorder %s17, 1
    %p112 = por %p110, %p111
    %p113 = scmp.ne.s32.totalorder %s104, %s105
    %p114 = scmp.eq.s32.totalorder %s17, 0
    %p115 = por %p113, %p114
    %p116 = scmp.ne.s32.totalorder %s104, %s105
    %p117 = scmp.eq.s32.totalorder %s18, 1
    %p118 = por %p116, %p117
    %p120 = scmp.ne.s32.totalorder %s105, %s119
    %p121 = scmp.eq.s32.totalorder %s18, 0
    %p122 = por %p120, %p121
    %s123 = ssub.s32 %s19, %s31
    %s124 = ssub.s32 %s20, %s27
    %s125 = sor.u32 %s123, %s124
    %p126 = scmp.eq.s32.totalorder %s125, 0
    %s128 = sadd.s32 %s127, 1
    %s129 = scalar_select %p126, %s127, %s128
    %p132 = pneg %p126
    %p133 = scmp.eq.s32.totalorder %s12, 1
    %p134 = por %p132, %p133
    %p135 = scmp.ne.s32.totalorder %s127, %s130
    %p136 = scmp.eq.s32.totalorder %s12, 0
    %p137 = por %p135, %p136
    %p138 = scmp.ne.s32.totalorder %s127, %s130
    %p139 = scmp.eq.s32.totalorder %s17, 1
    %p140 = por %p138, %p139
    %p141 = scmp.ne.s32.totalorder %s130, %s131
    %p142 = scmp.eq.s32.totalorder %s17, 0
    %p143 = por %p141, %p142
    %p144 = scmp.ne.s32.totalorder %s130, %s131
    %p145 = scmp.eq.s32.totalorder %s18, 1
    %p146 = por %p144, %p145
    %p148 = scmp.ne.s32.totalorder %s131, %s147
    %p149 = scmp.eq.s32.totalorder %s18, 0
    %p150 = por %p148, %p149
    %s151 = ssub.s32 %s19, %s31
    %s152 = ssub.s32 %s20, %s27
    %s153 = sor.u32 %s151, %s152
    %p154 = scmp.eq.s32.totalorder %s153, 0
    %s156 = sadd.s32 %s155, 1
    %s157 = scalar_select %p154, %s155, %s156
    %p160 = pneg %p154
    %p161 = scmp.eq.s32.totalorder %s12, 1
    %p162 = por %p160, %p161
    %p163 = scmp.ne.s32.totalorder %s155, %s158
    %p164 = scmp.eq.s32.totalorder %s12, 0
    %p165 = por %p163, %p164
    %p166 = scmp.ne.s32.totalorder %s155, %s158
    %p167 = scmp.eq.s32.totalorder %s17, 1
    %p168 = por %p166, %p167
    %p169 = scmp.ne.s32.totalorder %s158, %s159
    %p170 = scmp.eq.s32.totalorder %s17, 0
    %p171 = por %p169, %p170
    %p172 = scmp.ne.s32.totalorder %s158, %s159
    %p173 = scmp.eq.s32.totalorder %s18, 1
    %p174 = por %p172, %p173
    %p176 = scmp.ne.s32.totalorder %s159, %s175
    %p177 = scmp.eq.s32.totalorder %s18, 0
    %p178 = por %p176, %p177
    %p179 = scmp.le.s32.totalorder 1, %s12
    %p180 = scmp.lt.s32.totalorder %s12, 3
    %p181 = pnand %p179, %p180
    %p182 = pneg %p181
    // Predicated region
    $region9: #{res_basic_block.4} parent=5 // pred_check
      _
    $region10: #{res_basic_block.4} parent=5 // pred_check_branch
      %184 = sbr.rel (%p181) target = $region12
    $region11: #{res_basic_block.4} parent=5 // pred_region
      %s185 = ssub.s32 %s12, 1
      // Predicated region
      $region13: #{res_basic_block.4} parent=11 // pred_check
        %p186 = pneg %p73
      $region14: #{res_basic_block.4} parent=11 // pred_check_branch
        %188 = sbr.rel (%p186) target = $region16
      $region15: #{res_basic_block.4} parent=11 // pred_region
        _
      $region16: #{res_basic_block.4} parent=11 // pred_fallthru
        _
      // Predicated region
      $region17: #{res_basic_block.4} parent=11 // pred_check
        %p189 = pneg %p94
      $region18: #{res_basic_block.4} parent=11 // pred_check_branch
        %191 = sbr.rel (%p189) target = $region20
      $region19: #{res_basic_block.4} parent=11 // pred_region
        _
      $region20: #{res_basic_block.4} parent=11 // pred_fallthru
        _
      // Predicated region
      $region21: #{res_basic_block.4} parent=11 // pred_check
        %p192 = pneg %p115
      $region22: #{res_basic_block.4} parent=11 // pred_check_branch
        %194 = sbr.rel (%p192) target = $region24
      $region23: #{res_basic_block.4} parent=11 // pred_region
        _
      $region24: #{res_basic_block.4} parent=11 // pred_fallthru
        _
    $region12: #{res_basic_block.4} parent=5 // pred_fallthru
      _
    %p195 = scmp.lt.s32.totalorder %s12, 2
    // Predicated region
    $region25: #{res_basic_block.4} parent=5 // pred_check
      %p196 = pneg %p195
    $region26: #{res_basic_block.4} parent=5 // pred_check_branch
      %198 = sbr.rel (%p196) target = $region28
    $region27: #{res_basic_block.4} parent=5 // pred_region
      // Predicated region
      $region29: #{res_basic_block.4} parent=27 // pred_check
        %p199 = pneg %p46
      $region30: #{res_basic_block.4} parent=27 // pred_check_branch
        %201 = sbr.rel (%p199) target = $region32
      $region31: #{res_basic_block.4} parent=27 // pred_region
        %s202 = smul.u32 2, %s20
        %p203 = scmp.lt.s32.totalorder %s19, 1
        %s204 = scalar_select %p203, %s19, 1
        %p205 = scmp.lt.s32.totalorder %s202, 1
        %s206 = scalar_select %p205, %s202, 1
        %s207 = smul.addr %s204, 2
        %s208 = sadd.s32 %s206, %s207
        %s209 = smul.addr %s208, 4
        %s210 = scalar_lea.vmem %s0, %s209
        %s211 = smul.u32 2, %s20
      $region32: #{res_basic_block.4} parent=27 // pred_fallthru
        _
    $region28: #{res_basic_block.4} parent=5 // pred_fallthru
      _
    %p212 = scmp.le.s32.totalorder 1, %s12
    %p213 = scmp.lt.s32.totalorder %s12, 3
    %p214 = pnand %p212, %p213
    %p215 = pneg %p214
    // Predicated region
    $region33: #{res_basic_block.4} parent=5 // pred_check
      _
    $region34: #{res_basic_block.4} parent=5 // pred_check_branch
      %217 = sbr.rel (%p214) target = $region36
    $region35: #{res_basic_block.4} parent=5 // pred_region
      %s218 = ssub.s32 %s12, 1
      %s219 = smul.u32 2, %s22
      %p220 = scmp.lt.s32.totalorder %s21, 1
      %s221 = scalar_select %p220, %s21, 1
      %p222 = scmp.lt.s32.totalorder %s219, 1
      %s223 = scalar_select %p222, %s219, 1
      %s224 = smul.addr %s221, 2
      %s225 = sadd.s32 %s223, %s224
      %s226 = smul.addr %s225, 4
      %s227 = scalar_lea.vmem %s0, %s226
      %p228 = pneg %p52
      %p229 = pneg %p49
      %p230 = pneg %p73
      %p231 = pneg %p70
      %p232 = pneg %p94
      %p233 = pneg %p91
      %p234 = pneg %p115
      %p235 = pneg %p112
      %p236 = pneg %p143
      %p237 = pneg %p140
      %s238 = smul.u32 2, %s22
      %p239 = scmp.lt.s32.totalorder %s21, 1
      %s240 = scalar_select %p239, %s21, 1
      %p241 = scmp.lt.s32.totalorder %s238, 1
      %s242 = scalar_select %p241, %s238, 1
      %s243 = smul.addr %s240, 2
      %s244 = sadd.s32 %s242, %s243
      %s245 = smul.addr %s244, 4
      %s246 = scalar_lea.vmem %s4, %s245
      %p247 = pneg %p171
      %p248 = pneg %p168
      %p249 = scmp.lt.s32.totalorder %s21, 1
      %s250 = scalar_select %p249, %s21, 1
      %p251 = scmp.lt.s32.totalorder %s22, 0
      %s252 = scalar_select %p251, %s22, 0
      %s253 = sadd.s32 %s252, %s250
      %s254 = smul.addr %s253, 2
      %s255 = scalar_lea.vmem %s5, %s254
      %s256 = smul.u32 2, %s22
      %p257 = scmp.lt.s32.totalorder %s21, 1
      %s258 = scalar_select %p257, %s21, 1
      %p259 = scmp.lt.s32.totalorder %s256, 1
      %s260 = scalar_select %p259, %s256, 1
      %s261 = smul.addr %s258, 2
      %s262 = sadd.s32 %s260, %s261
      %s263 = smul.addr %s262, 4
      %s264 = scalar_lea.vmem %s0, %s263
      %s265 = smul.u32 2, %s22
      %s266 = smul.u32 2, %s22
      %p267 = scmp.lt.s32.totalorder %s21, 1
      %s268 = scalar_select %p267, %s21, 1
      %p269 = scmp.lt.s32.totalorder %s266, 1
      %s270 = scalar_select %p269, %s266, 1
      %s271 = smul.addr %s268, 2
      %s272 = sadd.s32 %s270, %s271
      %s273 = smul.addr %s272, 4
      %s274 = scalar_lea.vmem %s4, %s273
      %s275 = smul.u32 2, %s22
      %p276 = scmp.lt.s32.totalorder %s21, 1
      %s277 = scalar_select %p276, %s21, 1
      %p278 = scmp.lt.s32.totalorder %s22, 0
      %s279 = scalar_select %p278, %s22, 0
      %s280 = sadd.s32 %s279, %s277
      %s281 = smul.addr %s280, 2
      %s282 = scalar_lea.vmem %s5, %s281
      %v284 = vld [vmem:[%s264] sm:$0xf]
      %v285 = vld [vmem:[%s264 + $0x4] sm:$0xf]
      %v286 = vunpack.c.l.bf16 %v284
      %v287 = vunpack.c.l.bf16 %v285
      %v288 = vld [vmem:[%s2] sm:$0x1]
      %v290 = vlaneseq
      %v291 = vshrl.u32 %v290, 7
      %v292 = vsub.s32 0, %v291
      %v293 = vrot.slane %v288, %v292
      %v295 = vmul.f32 %v286, %v293
      %v296 = vmul.f32 %v287, %v293
      %v297 = vld [vmem:[%s3] sm:$0x1]
      %v299 = vlaneseq
      %v300 = vshrl.u32 %v299, 7
      %v301 = vsub.s32 0, %v300
      %v302 = vrot.slane %v297, %v301
      %v304 = vadd.f32 %v295, %v302
      %v305 = vadd.f32 %v296, %v302
      %v306 = vmax.f32 %v304, 0.0
      %v307 = vmax.f32 %v305, 0.0
      %v308 = vpack.c.bf16 %v307, %v306
      %v310 = vshrl.u32 %v308, 16
      %v312 = vrot.slane %v310, 7
      %v313 = vshll.u32 %v308, 16
      %v315 = vor.u32 %v312, %v313
      %vm317 = vcmask 1040384
      %vm318 = vsmask.f32 256
      %vm319 = vmand %vm317, %vm318
      %v320 = vsel %vm319, 0, %v315
      %v321 = vrot.slane %v313, 1
      %v322 = vor.u32 %v310, %v321
      %vm324 = vcmask 1047552
      %vm325 = vsmask.f32 7424
      %vm326 = vmand %vm324, %vm325
      %v327 = vsel %vm326, %v322, 0
      %s328 = scalar_lea.vmem %s1, 64
      %v329 = vld [vmem:[%s328] sm:$0xf]
      %v330 = vld [vmem:[%s328 + $0x4] sm:$0xf]
      %v331 = vld [vmem:[%s328 + $0x8] sm:$0xf]
      %v332 = vld [vmem:[%s328 + $0xc] sm:$0xf]
      %v333 = vld [vmem:[%s328 + $0x10] sm:$0xf]
      %v334 = vld [vmem:[%s328 + $0x14] sm:$0xf]
      %v335 = vld [vmem:[%s328 + $0x18] sm:$0xf]
      %v336 = vld [vmem:[%s328 + $0x1c] sm:$0xf]
      %v337 = vld [vmem:[%s328 + $0x20] sm:$0xf]
      %v338 = vld [vmem:[%s328 + $0x24] sm:$0xf]
      %v339 = vld [vmem:[%s328 + $0x28] sm:$0xf]
      %v340 = vld [vmem:[%s328 + $0x2c] sm:$0xf]
      %v341 = vld [vmem:[%s328 + $0x30] sm:$0xf]
      %v342 = vld [vmem:[%s328 + $0x34] sm:$0xf]
      %v343 = vld [vmem:[%s328 + $0x38] sm:$0xf]
      %v344 = vld [vmem:[%s328 + $0x3c] sm:$0xf]
      %v345 = vld [vmem:[%s1] sm:$0xf]
      %v346 = vld [vmem:[%s1 + $0x4] sm:$0xf]
      %v347 = vld [vmem:[%s1 + $0x8] sm:$0xf]
      %v348 = vld [vmem:[%s1 + $0xc] sm:$0xf]
      %v349 = vld [vmem:[%s1 + $0x10] sm:$0xf]
      %v350 = vld [vmem:[%s1 + $0x14] sm:$0xf]
      %v351 = vld [vmem:[%s1 + $0x18] sm:$0xf]
      %v352 = vld [vmem:[%s1 + $0x1c] sm:$0xf]
      %v353 = vld [vmem:[%s1 + $0x20] sm:$0xf]
      %v354 = vld [vmem:[%s1 + $0x24] sm:$0xf]
      %v355 = vld [vmem:[%s1 + $0x28] sm:$0xf]
      %v356 = vld [vmem:[%s1 + $0x2c] sm:$0xf]
      %v357 = vld [vmem:[%s1 + $0x30] sm:$0xf]
      %v358 = vld [vmem:[%s1 + $0x34] sm:$0xf]
      %v359 = vld [vmem:[%s1 + $0x38] sm:$0xf]
      %v360 = vld [vmem:[%s1 + $0x3c] sm:$0xf]
      %v377 = vunpack.c.l.b16 %v345
      %v378 = vunpack.c.l.b16 %v346
      %v379 = vunpack.c.l.b16 %v347
      %v380 = vunpack.c.l.b16 %v348
      %v381 = vunpack.c.l.b16 %v349
      %v382 = vunpack.c.l.b16 %v350
      %v383 = vunpack.c.l.b16 %v351
      %v384 = vunpack.c.l.b16 %v352
      %v385 = vunpack.c.l.b16 %v353
      %v386 = vunpack.c.l.b16 %v354
      %v387 = vunpack.c.l.b16 %v355
      %v388 = vunpack.c.l.b16 %v356
      %v389 = vunpack.c.l.b16 %v357
      %v390 = vunpack.c.l.b16 %v358
      %v391 = vunpack.c.l.b16 %v359
      %v392 = vunpack.c.l.b16 %v360
      %v393 = vpack.c.b16 %v378, %v377
      %v394 = vpack.c.b16 %v380, %v379
      %v395 = vpack.c.b16 %v382, %v381
      %v396 = vpack.c.b16 %v384, %v383
      %v397 = vpack.c.b16 %v386, %v385
      %v398 = vpack.c.b16 %v388, %v387
      %v399 = vpack.c.b16 %v390, %v389
      %v400 = vpack.c.b16 %v392, %v391
      %409 = vmatprep.subr.bf16.mxu0 0
      %410 = vmatpush1.bf16.msra.mxu0 %v400
      %411 = vmatprep.subr.bf16.mxu0 0
      %412 = vmatpush1.bf16.msra.mxu0 %v399
      %413 = vmatprep.subr.bf16.mxu0 0
      %414 = vmatpush1.bf16.msra.mxu0 %v398
      %415 = vmatprep.subr.bf16.mxu0 0
      %416 = vmatpush1.bf16.msra.mxu0 %v397
      %417 = vmatprep.subr.bf16.mxu0 0
      %418 = vmatpush1.bf16.msra.mxu0 %v396
      %419 = vmatprep.subr.bf16.mxu0 0
      %420 = vmatpush1.bf16.msra.mxu0 %v395
      %421 = vmatprep.subr.bf16.mxu0 0
      %422 = vmatpush1.bf16.msra.mxu0 %v394
      %423 = vmatprep.subr.bf16.mxu0 0
      %424 = vmatpush1.bf16.msra.mxu0 %v393
      %425 = vmatprep.subr.bf16.mxu0 0
      %426 = vmatpush2.bf16.msra.mxu0 0
      %427 = vmatprep.subr.bf16.mxu0 0
      %428 = vmatpush2.bf16.msra.mxu0 0
      %429 = vmatprep.subr.bf16.mxu0 0
      %430 = vmatpush2.bf16.msra.mxu0 0
      %431 = vmatprep.subr.bf16.mxu0 0
      %432 = vmatpush2.bf16.msra.mxu0 0
      %433 = vmatprep.subr.bf16.mxu0 0
      %434 = vmatpush2.bf16.msra.mxu0 0
      %435 = vmatprep.subr.bf16.mxu0 0
      %436 = vmatpush2.bf16.msra.mxu0 0
      %437 = vmatprep.subr.bf16.mxu0 0
      %438 = vmatpush2.bf16.msra.mxu0 0
      %439 = vmatprep.subr.bf16.mxu0 0
      %440 = vmatpush2.bf16.msra.mxu0 0
      %441 = vmatprep.mubr.bf16.mxu0 0
      %442 = vmatmul.mubr.bf16.gmra.mxu0 %v320
      %v443 = vpop.f32.mrf.mxu0
      %v444 = vadd.f32 0.0, %v443
      %v445 = vpop.f32.mrf.mxu0
      %v446 = vpop.f32.mrf.mxu0
      %v447 = vadd.f32 0.0, %v446
      %v448 = vpop.f32.mrf.mxu0
      %449 = vdwg.mxu0
      %v466 = vunpack.c.l.b16 %v329
      %v467 = vunpack.c.l.b16 %v330
      %v468 = vunpack.c.l.b16 %v331
      %v469 = vunpack.c.l.b16 %v332
      %v470 = vunpack.c.l.b16 %v333
      %v471 = vunpack.c.l.b16 %v334
      %v472 = vunpack.c.l.b16 %v335
      %v473 = vunpack.c.l.b16 %v336
      %v474 = vunpack.c.l.b16 %v337
      %v475 = vunpack.c.l.b16 %v338
      %v476 = vunpack.c.l.b16 %v339
      %v477 = vunpack.c.l.b16 %v340
      %v478 = vunpack.c.l.b16 %v341
      %v479 = vunpack.c.l.b16 %v342
      %v480 = vunpack.c.l.b16 %v343
      %v481 = vunpack.c.l.b16 %v344
      %v482 = vpack.c.b16 %v467, %v466
      %v483 = vpack.c.b16 %v469, %v468
      %v484 = vpack.c.b16 %v471, %v470
      %v485 = vpack.c.b16 %v473, %v472
      %v486 = vpack.c.b16 %v475, %v474
      %v487 = vpack.c.b16 %v477, %v476
      %v488 = vpack.c.b16 %v479, %v478
      %v489 = vpack.c.b16 %v481, %v480
      %498 = vmatprep.subr.bf16.mxu0 0
      %499 = vmatpush1.bf16.msra.mxu0 %v489
      %500 = vmatprep.subr.bf16.mxu0 0
      %501 = vmatpush1.bf16.msra.mxu0 %v488
      %502 = vmatprep.subr.bf16.mxu0 0
      %503 = vmatpush1.bf16.msra.mxu0 %v487
      %504 = vmatprep.subr.bf16.mxu0 0
      %505 = vmatpush1.bf16.msra.mxu0 %v486
      %506 = vmatprep.subr.bf16.mxu0 0
      %507 = vmatpush1.bf16.msra.mxu0 %v485
      %508 = vmatprep.subr.bf16.mxu0 0
      %509 = vmatpush1.bf16.msra.mxu0 %v484
      %510 = vmatprep.subr.bf16.mxu0 0
      %511 = vmatpush1.bf16.msra.mxu0 %v483
      %512 = vmatprep.subr.bf16.mxu0 0
      %513 = vmatpush1.bf16.msra.mxu0 %v482
      %514 = vmatprep.subr.bf16.mxu0 0
      %515 = vmatpush2.bf16.msra.mxu0 0
      %516 = vmatprep.subr.bf16.mxu0 0
      %517 = vmatpush2.bf16.msra.mxu0 0
      %518 = vmatprep.subr.bf16.mxu0 0
      %519 = vmatpush2.bf16.msra.mxu0 0
      %520 = vmatprep.subr.bf16.mxu0 0
      %521 = vmatpush2.bf16.msra.mxu0 0
      %522 = vmatprep.subr.bf16.mxu0 0
      %523 = vmatpush2.bf16.msra.mxu0 0
      %524 = vmatprep.subr.bf16.mxu0 0
      %525 = vmatpush2.bf16.msra.mxu0 0
      %526 = vmatprep.subr.bf16.mxu0 0
      %527 = vmatpush2.bf16.msra.mxu0 0
      %528 = vmatprep.subr.bf16.mxu0 0
      %529 = vmatpush2.bf16.msra.mxu0 0
      %530 = vmatprep.mubr.bf16.mxu0 0
      %531 = vmatmul.mubr.bf16.gmra.mxu0 %v308
      %v532 = vpop.f32.mrf.mxu0
      %v533 = vadd.f32 %v444, %v532
      %v534 = vpop.f32.mrf.mxu0
      %v535 = vpop.f32.mrf.mxu0
      %v536 = vadd.f32 %v447, %v535
      %v537 = vpop.f32.mrf.mxu0
      %538 = vdwg.mxu0
      %s539 = scalar_lea.vmem %s1, 128
      %v540 = vld [vmem:[%s539] sm:$0xf]
      %v541 = vld [vmem:[%s539 + $0x4] sm:$0xf]
      %v542 = vld [vmem:[%s539 + $0x8] sm:$0xf]
      %v543 = vld [vmem:[%s539 + $0xc] sm:$0xf]
      %v544 = vld [vmem:[%s539 + $0x10] sm:$0xf]
      %v545 = vld [vmem:[%s539 + $0x14] sm:$0xf]
      %v546 = vld [vmem:[%s539 + $0x18] sm:$0xf]
      %v547 = vld [vmem:[%s539 + $0x1c] sm:$0xf]
      %v548 = vld [vmem:[%s539 + $0x20] sm:$0xf]
      %v549 = vld [vmem:[%s539 + $0x24] sm:$0xf]
      %v550 = vld [vmem:[%s539 + $0x28] sm:$0xf]
      %v551 = vld [vmem:[%s539 + $0x2c] sm:$0xf]
      %v552 = vld [vmem:[%s539 + $0x30] sm:$0xf]
      %v553 = vld [vmem:[%s539 + $0x34] sm:$0xf]
      %v554 = vld [vmem:[%s539 + $0x38] sm:$0xf]
      %v555 = vld [vmem:[%s539 + $0x3c] sm:$0xf]
      %v572 = vunpack.c.l.b16 %v540
      %v573 = vunpack.c.l.b16 %v541
      %v574 = vunpack.c.l.b16 %v542
      %v575 = vunpack.c.l.b16 %v543
      %v576 = vunpack.c.l.b16 %v544
      %v577 = vunpack.c.l.b16 %v545
      %v578 = vunpack.c.l.b16 %v546
      %v579 = vunpack.c.l.b16 %v547
      %v580 = vunpack.c.l.b16 %v548
      %v581 = vunpack.c.l.b16 %v549
      %v582 = vunpack.c.l.b16 %v550
      %v583 = vunpack.c.l.b16 %v551
      %v584 = vunpack.c.l.b16 %v552
      %v585 = vunpack.c.l.b16 %v553
      %v586 = vunpack.c.l.b16 %v554
      %v587 = vunpack.c.l.b16 %v555
      %v588 = vpack.c.b16 %v573, %v572
      %v589 = vpack.c.b16 %v575, %v574
      %v590 = vpack.c.b16 %v577, %v576
      %v591 = vpack.c.b16 %v579, %v578
      %v592 = vpack.c.b16 %v581, %v580
      %v593 = vpack.c.b16 %v583, %v582
      %v594 = vpack.c.b16 %v585, %v584
      %v595 = vpack.c.b16 %v587, %v586
      %604 = vmatprep.subr.bf16.mxu0 0
      %605 = vmatpush1.bf16.msra.mxu0 %v595
      %606 = vmatprep.subr.bf16.mxu0 0
      %607 = vmatpush1.bf16.msra.mxu0 %v594
      %608 = vmatprep.subr.bf16.mxu0 0
      %609 = vmatpush1.bf16.msra.mxu0 %v593
      %610 = vmatprep.subr.bf16.mxu0 0
      %611 = vmatpush1.bf16.msra.mxu0 %v592
      %612 = vmatprep.subr.bf16.mxu0 0
      %613 = vmatpush1.bf16.msra.mxu0 %v591
      %614 = vmatprep.subr.bf16.mxu0 0
      %615 = vmatpush1.bf16.msra.mxu0 %v590
      %616 = vmatprep.subr.bf16.mxu0 0
      %617 = vmatpush1.bf16.msra.mxu0 %v589
      %618 = vmatprep.subr.bf16.mxu0 0
      %619 = vmatpush1.bf16.msra.mxu0 %v588
      %620 = vmatprep.subr.bf16.mxu0 0
      %621 = vmatpush2.bf16.msra.mxu0 0
      %622 = vmatprep.subr.bf16.mxu0 0
      %623 = vmatpush2.bf16.msra.mxu0 0
      %624 = vmatprep.subr.bf16.mxu0 0
      %625 = vmatpush2.bf16.msra.mxu0 0
      %626 = vmatprep.subr.bf16.mxu0 0
      %627 = vmatpush2.bf16.msra.mxu0 0
      %628 = vmatprep.subr.bf16.mxu0 0
      %629 = vmatpush2.bf16.msra.mxu0 0
      %630 = vmatprep.subr.bf16.mxu0 0
      %631 = vmatpush2.bf16.msra.mxu0 0
      %632 = vmatprep.subr.bf16.mxu0 0
      %633 = vmatpush2.bf16.msra.mxu0 0
      %634 = vmatprep.subr.bf16.mxu0 0
      %635 = vmatpush2.bf16.msra.mxu0 0
      %636 = vmatprep.mubr.bf16.mxu0 0
      %637 = vmatmul.mubr.bf16.gmra.mxu0 %v327
      %v638 = vpop.f32.mrf.mxu0
      %v639 = vadd.f32 0.0, %v638
      %v640 = vpop.f32.mrf.mxu0
      %v641 = vpop.f32.mrf.mxu0
      %v642 = vadd.f32 0.0, %v641
      %v643 = vpop.f32.mrf.mxu0
      %644 = vdwg.mxu0
      %v645 = vadd.f32 %v533, %v639
      %v646 = vadd.f32 %v536, %v642
      %v647 = vpack.c.bf16 %v646, %v645
      %v649 = vunpack.c.l.b16 %v647
      %v650 = vunpack.c.h.b16 %v647
      %v651 = vpack.c.b16 %v649, %v649
      %v652 = vpack.c.b16 %v650, %v650
      %655 = vst [vmem:[%s274] sm:$0xf] %v651
      %656 = vst [vmem:[%s274 + $0x4] sm:$0xf] %v652
      %v657 = vunpack.c.l.bf16 %v647
      %v658 = vunpack.c.h.bf16 %v647
      %v659 = vadd.f32 %v657, %v658
      %v660 = vrot.slane %v659, 4
      %v661 = vadd.f32 %v659, %v660
      %v662 = vrot.slane %v661, 2
      %v663 = vadd.f32 %v661, %v662
      %v664 = vrot.slane %v663, 1
      %v665 = vadd.f32 %v663, %v664
      %v666 = vmul.f32 %v657, %v657
      %v667 = vmul.f32 %v658, %v658
      %v668 = vadd.f32 %v666, %v667
      %v669 = vrot.slane %v668, 4
      %v670 = vadd.f32 %v668, %v669
      %v671 = vrot.slane %v670, 2
      %v672 = vadd.f32 %v670, %v671
      %v673 = vrot.slane %v672, 1
      %v674 = vadd.f32 %v672, %v673
      %vm675 = vcmask 1040384
      %v676 = vsel %vm675, %v665, %v674
      %677 = vst [vmem:[%s282] sm:$0x3] %v676
      %s678 = smul.u32 2, %s22
      %p679 = scmp.lt.s32.totalorder %s21, 1
      %s680 = scalar_select %p679, %s21, 1
      %p681 = scmp.lt.s32.totalorder %s678, 1
      %s682 = scalar_select %p681, %s678, 1
      %s683 = smul.addr %s680, 2
      %s684 = sadd.s32 %s682, %s683
      %s685 = smul.addr %s684, 4
      %s686 = scalar_lea.vmem %s4, %s685
      %p687 = scmp.lt.s32.totalorder %s21, 1
      %s688 = scalar_select %p687, %s21, 1
      %p689 = scmp.lt.s32.totalorder %s22, 0
      %s690 = scalar_select %p689, %s22, 0
      %s691 = sadd.s32 %s690, %s688
      %s692 = smul.addr %s691, 2
      %s693 = scalar_lea.vmem %s5, %s692
      // Predicated region
      $region37: #{res_basic_block.4} parent=35 // pred_check
        %p694 = pneg %p140
      $region38: #{res_basic_block.4} parent=35 // pred_check_branch
        %696 = sbr.rel (%p694) target = $region40
      $region39: #{res_basic_block.4} parent=35 // pred_region
        %s697 = smul.u32 2, %s22
      $region40: #{res_basic_block.4} parent=35 // pred_fallthru
        _
      // Predicated region
      $region41: #{res_basic_block.4} parent=35 // pred_check
        %p698 = pneg %p168
      $region42: #{res_basic_block.4} parent=35 // pred_check_branch
        %700 = sbr.rel (%p698) target = $region44
      $region43: #{res_basic_block.4} parent=35 // pred_region
        _
      $region44: #{res_basic_block.4} parent=35 // pred_fallthru
        _
    $region36: #{res_basic_block.4} parent=5 // pred_fallthru
      _
    %p701 = scmp.le.s32.totalorder 2, %s12
    // Predicated region
    $region45: #{res_basic_block.4} parent=5 // pred_check
      %p702 = pneg %p701
    $region46: #{res_basic_block.4} parent=5 // pred_check_branch
      %704 = sbr.rel (%p702) target = $region48
    $region47: #{res_basic_block.4} parent=5 // pred_region
      %s705 = ssub.s32 %s12, 2
      // Predicated region
      $region49: #{res_basic_block.4} parent=47 // pred_check
        %p706 = pneg %p146
      $region50: #{res_basic_block.4} parent=47 // pred_check_branch
        %708 = sbr.rel (%p706) target = $region52
      $region51: #{res_basic_block.4} parent=47 // pred_region
        %s709 = smul.u32 2, %s24
        %p710 = scmp.lt.s32.totalorder %s23, 1
        %s711 = scalar_select %p710, %s23, 1
        %p712 = scmp.lt.s32.totalorder %s709, 1
        %s713 = scalar_select %p712, %s709, 1
        %s714 = smul.addr %s711, 2
        %s715 = sadd.s32 %s713, %s714
        %s716 = smul.addr %s715, 4
        %s717 = scalar_lea.vmem %s4, %s716
      $region52: #{res_basic_block.4} parent=47 // pred_fallthru
        _
      // Predicated region
      $region53: #{res_basic_block.4} parent=47 // pred_check
        %p718 = pneg %p174
      $region54: #{res_basic_block.4} parent=47 // pred_check_branch
        %720 = sbr.rel (%p718) target = $region56
      $region55: #{res_basic_block.4} parent=47 // pred_region
        %p721 = scmp.lt.s32.totalorder %s23, 1
        %s722 = scalar_select %p721, %s23, 1
        %p723 = scmp.lt.s32.totalorder %s24, 0
        %s724 = scalar_select %p723, %s24, 0
        %s725 = sadd.s32 %s724, %s722
        %s726 = smul.addr %s725, 2
        %s727 = scalar_lea.vmem %s5, %s726
      $region56: #{res_basic_block.4} parent=47 // pred_fallthru
        _
    $region48: #{res_basic_block.4} parent=5 // pred_fallthru
      _
  $region6: #{res_basic_block.4} parent=0 // loop_footer
    %s16 = sadd.s32 1, %s12
  $region7: #{res_basic_block.4} parent=0 // loop_footer_branch
    %11 = sbr.rel target = $region3
  $region8: #{res_basic_block.4} parent=0 // loop_exit
    _

// kernel: res_basic_block.5
$region0: #{res_basic_block.5}
  #allocation0 [shape = 'u32[]', space=smem, size = 0x4, offset = 0x4, fixed_abs, tag = 'smem constant byte address 0x4 - core index']
  #allocation1 [shape = 'u32[144,128]{1,0:T(1,128)}', space=vmem, size = 0x12000, scoped, tag = 'internal scratch']
  %s0 = inlined_call_operand.vmem [shape: bf16[32,128], index: 0, kind: input, shape index: {}]
  %s1 = inlined_call_operand.vmem [shape: bf16[32,128], index: 1, kind: input, shape index: {}]
  %s2 = inlined_call_operand.vmem [shape: f32[1,128], index: 2, kind: input, shape index: {}]
  %s3 = inlined_call_operand.vmem [shape: f32[1,128], index: 3, kind: input, shape index: {}]
  %s4 = inlined_call_operand.vmem [shape: f32[32,128], index: 4, kind: output, shape index: {}]
  %s5 = sld [smem:[#allocation0]]
  $region26: #{res_basic_block.5} parent=0
    _
  %s7 = ssub.s32 1, %s5
  %s8 = scalar_select 0, %s7, %s5
  // Predicated region
  $region2: #{res_basic_block.5} parent=0 // pred_check
    _
  $region3: #{res_basic_block.5} parent=0 // pred_check_branch
    %10 = sbr.rel (0) target = $region5
  $region4: #{res_basic_block.5} parent=0 // pred_region
    _
  $region5: #{res_basic_block.5} parent=0 // pred_fallthru
    _
  // Predicated region
  $region6: #{res_basic_block.5} parent=0 // pred_check
    _
  $region7: #{res_basic_block.5} parent=0 // pred_check_branch
    %12 = sbr.rel (0) target = $region9
  $region8: #{res_basic_block.5} parent=0 // pred_region
    _
  $region9: #{res_basic_block.5} parent=0 // pred_fallthru
    _
  // Predicated region
  $region10: #{res_basic_block.5} parent=0 // pred_check
    _
  $region11: #{res_basic_block.5} parent=0 // pred_check_branch
    %14 = sbr.rel (0) target = $region13
  $region12: #{res_basic_block.5} parent=0 // pred_region
    _
  $region13: #{res_basic_block.5} parent=0 // pred_fallthru
    _
  // Predicated region
  $region14: #{res_basic_block.5} parent=0 // pred_check
    _
  $region15: #{res_basic_block.5} parent=0 // pred_check_branch
    %16 = sbr.rel (0) target = $region17
  $region16: #{res_basic_block.5} parent=0 // pred_region
    _
  $region17: #{res_basic_block.5} parent=0 // pred_fallthru
    _
  %v17 = vld [vmem:[%s0] sm:$0xf]
  %v18 = vld [vmem:[%s0 + $0x4] sm:$0xf]
  %v19 = vld [vmem:[%s0 + $0x8] sm:$0xf]
  %v20 = vld [vmem:[%s0 + $0xc] sm:$0xf]
  %v21 = vunpack.c.l.bf16 %v17
  %v22 = vunpack.c.l.bf16 %v18
  %v23 = vunpack.c.l.bf16 %v19
  %v24 = vunpack.c.l.bf16 %v20
  %v25 = vld [vmem:[%s2] sm:$0x1]
  %v27 = vlaneseq
  %v28 = vshrl.u32 %v27, 7
  %v29 = vsub.s32 0, %v28
  %v30 = vrot.slane %v25, %v29
  %v32 = vmul.f32 %v21, %v30
  %v33 = vmul.f32 %v22, %v30
  %v34 = vmul.f32 %v23, %v30
  %v35 = vmul.f32 %v24, %v30
  %v36 = vld [vmem:[%s3] sm:$0x1]
  %v38 = vlaneseq
  %v39 = vshrl.u32 %v38, 7
  %v40 = vsub.s32 0, %v39
  %v41 = vrot.slane %v36, %v40
  %v43 = vadd.f32 %v32, %v41
  %v44 = vadd.f32 %v33, %v41
  %v45 = vadd.f32 %v34, %v41
  %v46 = vadd.f32 %v35, %v41
  %v47 = vld [vmem:[%s1] sm:$0xf]
  %v48 = vld [vmem:[%s1 + $0x4] sm:$0xf]
  %v49 = vld [vmem:[%s1 + $0x8] sm:$0xf]
  %v50 = vld [vmem:[%s1 + $0xc] sm:$0xf]
  %v51 = vunpack.c.l.bf16 %v47
  %v52 = vunpack.c.l.bf16 %v48
  %v53 = vunpack.c.l.bf16 %v49
  %v54 = vunpack.c.l.bf16 %v50
  %v55 = vadd.f32 %v43, %v51
  %v56 = vadd.f32 %v44, %v52
  %v57 = vadd.f32 %v45, %v53
  %v58 = vadd.f32 %v46, %v54
  %v59 = vmax.f32 %v55, 0.0
  %v60 = vmax.f32 %v56, 0.0
  %v61 = vmax.f32 %v57, 0.0
  %v62 = vmax.f32 %v58, 0.0
  %63 = vst [vmem:[%s4] sm:$0xff] %v59
  %64 = vst [vmem:[%s4 + $0x8] sm:$0xff] %v60
  %65 = vst [vmem:[%s4 + $0x10] sm:$0xff] %v61
  %66 = vst [vmem:[%s4 + $0x18] sm:$0xff] %v62
  // Predicated region
  $region18: #{res_basic_block.5} parent=0 // pred_check
    _
  $region19: #{res_basic_block.5} parent=0 // pred_check_branch
    %68 = sbr.rel (0) target = $region21
  $region20: #{res_basic_block.5} parent=0 // pred_region
    _
  $region21: #{res_basic_block.5} parent=0 // pred_fallthru
    _
  // Predicated region
  $region22: #{res_basic_block.5} parent=0 // pred_check
    _
  $region23: #{res_basic_block.5} parent=0 // pred_check_branch
    %70 = sbr.rel (0) target = $region25
  $region24: #{res_basic_block.5} parent=0 // pred_region
    _
  $region25: #{res_basic_block.5} parent=0 // pred_fallthru
    _

</llo_original>
